<compile_context>
chip_gen: v7x
topology: tpu7x:2x2x1
jax: 0.10.0
libtpu: 0.0.40
codegen_flags: <defaults>
</compile_context>

<pallas_src>
import functools

import jax
import jax.numpy as jnp
from jax.experimental import pallas as pl
from jax.experimental.pallas import tpu as pltpu

LRELU_SLOPE = 0.1
BN_EPS = 1e-5
VMEM_LIMIT_BYTES = 48 * 1024 * 1024


# ----------------------------- Pallas kernels ------------------------------ #

def _conv_tap_kernel(x_ref, w_ref, b_ref, *rest, k, stride, ho, wq, has_res):
    """Fused conv (k*k tap loop) + folded-BN bias + LeakyReLU (+ residual add).

    x_ref: (s*s, L, cin)   bf16  -- phase-decomposed, zero-padded, flattened image
    w_ref: (k*k, cin, cout) bf16 -- BN scale already folded in
    b_ref: (1, cout)        f32
    rest : ([r_ref (1, M, cout) bf16], o_ref (1, M, cout) bf16) with M = ho*wq
           (columns wo..wq-1 of each output row are garbage and sliced off in glue)
    """
    if has_res:
        r_ref, o_ref = rest
    else:
        (o_ref,) = rest
    s = stride
    cout = w_ref.shape[-1]
    m = ho * wq
    acc = jnp.zeros((m, cout), jnp.float32)
    for kh in range(k):
        for kw in range(k):
            pid = (kh % s) * s + (kw % s)          # stride phase of this tap
            off = (kh // s) * wq + (kw // s)       # row offset inside the phase
            tap = x_ref[pid, off:off + m, :]       # (m, cin) bf16, contiguous slab
            acc = acc + jnp.dot(tap, w_ref[kh * k + kw],
                                preferred_element_type=jnp.float32)
    y = acc + b_ref[...]
    y = jnp.where(y >= 0, y, LRELU_SLOPE * y)
    if has_res:
        y = y + r_ref[0].astype(jnp.float32)
    o_ref[...] = y[None].astype(o_ref.dtype)


def _spp_pool_kernel(x_ref, o_ref, *, h, w):
    """x_ref: (1, h+12, w+12, c) padded with -inf.
    o_ref: (1, h, w, 4c) = concat([y, maxpool5(y), maxpool9(y), maxpool13(y)], C).
    pool9/pool13 are built by composing separable 5-pools."""
    xp = x_ref[0]                                   # (h+12, w+12, c)

    def pool5_valid(a):                             # separable: rows then cols
        hh, ww = a.shape[0], a.shape[1]
        r = a[0:hh - 4]
        for i in range(1, 5):
            r = jnp.maximum(r, a[i:i + hh - 4])
        out = r[:, 0:ww - 4]
        for j in range(1, 5):
            out = jnp.maximum(out, r[:, j:j + ww - 4])
        return out

    a1 = pool5_valid(xp)     # extended pool5  (offset 4)
    a2 = pool5_valid(a1)     # extended pool9  (offset 2)
    a3 = pool5_valid(a2)     # pool13 ("same" padding), exact
    y = xp[6:6 + h, 6:6 + w]
    p5 = a1[4:4 + h, 4:4 + w]
    p9 = a2[2:2 + h, 2:2 + w]
    o_ref[...] = jnp.concatenate([y, p5, p9, a3], axis=-1)[None].astype(o_ref.dtype)


# ------------------------------- op wrappers ------------------------------- #

def conv_bn_lrelu(x, w, scale, bias, stride, residual=None):
    """x: (N,H,W,Cin) bf16 NHWC.  w: (k,k,Cin,Cout) f32.  Returns (N,Ho,Wo,Cout) bf16."""
    n, h, wd, cin = x.shape
    k = w.shape[0]
    cout = w.shape[-1]
    s = stride
    p = (k - 1) // 2
    ho = (h + 2 * p - k) // s + 1
    wo = (wd + 2 * p - k) // s + 1
    hq = -(-(h + 2 * p) // s)                      # padded rows per stride-phase
    wq = -(-(wd + 2 * p) // s)                     # padded cols per stride-phase
    extra = (k - 1) // s                           # extra zero rows so slabs fit

    # zero pad (PyTorch Conv2d padding) + round spatial dims up to a multiple of s
    xp = jnp.pad(x, ((0, 0), (p, hq * s - h - p), (p, wq * s - wd - p), (0, 0)))
    if s == 1:
        xph = xp.reshape(n, 1, hq * wq, cin)
    else:                                          # stride-phase decomposition (glue)
        xph = xp.reshape(n, hq, s, wq, s, cin).transpose(0, 2, 4, 1, 3, 5)
        xph = xph.reshape(n, s * s, hq * wq, cin)
    if extra:
        xph = jnp.pad(xph, ((0, 0), (0, 0), (0, extra), (0, 0)))
    ell = hq * wq + extra
    m = ho * wq                                    # output rows/image (wq-wide)
    xph = xph.reshape(n * s * s, ell, cin)

    wt = (w * scale[None, None, None, :]).reshape(k * k, cin, cout).astype(jnp.bfloat16)
    b2 = bias.reshape(1, cout).astype(jnp.float32)

    in_specs = [
        pl.BlockSpec((s * s, ell, cin), lambda i: (i, 0, 0)),
        pl.BlockSpec((k * k, cin, cout), lambda i: (0, 0, 0)),
        pl.BlockSpec((1, cout), lambda i: (0, 0)),
    ]
    args = [xph, wt, b2]
    has_res = residual is not None
    if has_res:
        r = jnp.pad(residual, ((0, 0), (0, 0), (0, wq - wo), (0, 0)))
        args.append(r.reshape(n, m, cout))
        in_specs.append(pl.BlockSpec((1, m, cout), lambda i: (i, 0, 0)))

    kernel = functools.partial(_conv_tap_kernel, k=k, stride=s, ho=ho, wq=wq,
                               has_res=has_res)
    bytes_acc = (n * s * s * ell * cin * 2 + k * k * cin * cout * 2 + cout * 4
                 + n * m * cout * 2 * (2 if has_res else 1))
    out = pl.pallas_call(
        kernel,
        out_shape=jax.ShapeDtypeStruct((n, m, cout), jnp.bfloat16),
        grid=(n,),
        in_specs=in_specs,
        out_specs=pl.BlockSpec((1, m, cout), lambda i: (i, 0, 0)),
        compiler_params=pltpu.CompilerParams(
            dimension_semantics=("parallel",),
            vmem_limit_bytes=VMEM_LIMIT_BYTES),
        cost_estimate=pl.CostEstimate(
            flops=2 * n * m * k * k * cin * cout,
            transcendentals=0,
            bytes_accessed=int(bytes_acc)),
    )(*args)
    # drop the (wq - wo) garbage columns; fuses with the next layer's pad in XLA
    return out.reshape(n, ho, wq, cout)[:, :, :wo, :]


def spp_pool_concat(x):
    """SPPBottleneck pooling: concat([x, maxpool5, maxpool9, maxpool13], channels)."""
    n, h, wd, c = x.shape
    pad = 6                                        # reach of the composed 13-pool
    xpad = jnp.pad(x, ((0, 0), (pad, pad), (pad, pad), (0, 0)),
                   constant_values=-jnp.inf)
    hp, wp = h + 2 * pad, wd + 2 * pad
    return pl.pallas_call(
        functools.partial(_spp_pool_kernel, h=h, w=wd),
        out_shape=jax.ShapeDtypeStruct((n, h, wd, 4 * c), x.dtype),
        grid=(n,),
        in_specs=[pl.BlockSpec((1, hp, wp, c), lambda i: (i, 0, 0, 0))],
        out_specs=pl.BlockSpec((1, h, wd, 4 * c), lambda i: (i, 0, 0, 0)),
        compiler_params=pltpu.CompilerParams(
            dimension_semantics=("parallel",),
            vmem_limit_bytes=VMEM_LIMIT_BYTES),
        cost_estimate=pl.CostEstimate(
            flops=30 * n * hp * wp * c,
            transcendentals=0,
            bytes_accessed=n * c * (hp * wp + 4 * h * wd) * 2),
    )(xpad)


# --------------------------- parameter construction ------------------------ #

def make_baseconv_params(key, cin, cout, k):
    k1, k2, k3, k4, k5 = jax.random.split(key, 5)
    w = jax.random.normal(k1, (k, k, cin, cout), jnp.float32) / jnp.sqrt(
        jnp.float32(k * k * cin))
    gamma = 1.0 + 0.1 * jax.random.normal(k2, (cout,), jnp.float32)
    beta = 0.1 * jax.random.normal(k3, (cout,), jnp.float32)
    rmean = 0.1 * jax.random.normal(k4, (cout,), jnp.float32)
    rvar = 1.0 + 0.1 * jax.random.uniform(k5, (cout,), jnp.float32)
    scale = gamma / jnp.sqrt(rvar + BN_EPS)          # BN folded (eval mode)
    bias = beta - rmean * scale
    return {'w': w, 'scale': scale, 'bias': bias}


def init_group_layer(key, cin, num_blocks):
    keys = jax.random.split(key, 1 + 2 * num_blocks)
    params = {'conv': make_baseconv_params(keys[0], cin, cin * 2, 3), 'res': []}
    c = cin * 2
    for b in range(num_blocks):
        p1 = make_baseconv_params(keys[1 + 2 * b], c, c // 2, 1)
        p2 = make_baseconv_params(keys[2 + 2 * b], c // 2, c, 3)
        params['res'].append((p1, p2))
    return params


def init_spp_block(key, filters_list, in_filters):
    f0, f1 = filters_list
    hidden = f1 // 2
    ks = jax.random.split(key, 6)
    return {
        'c1': make_baseconv_params(ks[0], in_filters, f0, 1),
        'c2': make_baseconv_params(ks[1], f0, f1, 3),
        'spp_c1': make_baseconv_params(ks[2], f1, hidden, 1),
        'spp_c2': make_baseconv_params(ks[3], hidden * 4, f0, 1),
        'c3': make_baseconv_params(ks[4], f0, f1, 3),
        'c4': make_baseconv_params(ks[5], f1, f0, 1),
    }


def init_darknet(key, depth=21, in_channels=3, stem_out=8):
    blocks = {21: [1, 2, 2, 1], 53: [2, 8, 8, 4]}[depth]
    ks = jax.random.split(key, 7)
    params = {}
    params['stem_conv'] = make_baseconv_params(ks[0], in_channels, stem_out, 3)
    params['stem_group'] = init_group_layer(ks[1], stem_out, 1)
    c = stem_out * 2
    params['dark2'] = init_group_layer(ks[2], c, blocks[0]); c *= 2
    params['dark3'] = init_group_layer(ks[3], c, blocks[1]); c *= 2
    params['dark4'] = init_group_layer(ks[4], c, blocks[2]); c *= 2
    params['dark5_group'] = init_group_layer(ks[5], c, blocks[3])
    params['dark5_spp'] = init_spp_block(ks[6], [c, c * 2], c * 2)
    return params


# -------------------------------- forward --------------------------------- #

def baseconv(x, p, stride, residual=None):
    return conv_bn_lrelu(x, p['w'], p['scale'], p['bias'], stride, residual)


def reslayer(x, p1, p2):
    y = baseconv(x, p1, 1)
    return baseconv(y, p2, 1, residual=x)   # x + conv2(conv1(x)), add fused in kernel


def apply_group_layer(x, params, stride):
    x = baseconv(x, params['conv'], stride)
    for (p1, p2) in params['res']:
        x = reslayer(x, p1, p2)
    return x


def apply_spp_block(x, p):
    x = baseconv(x, p['c1'], 1)
    x = baseconv(x, p['c2'], 1)
    y = baseconv(x, p['spp_c1'], 1)
    y = spp_pool_concat(y)                   # fused [y, pool5, pool9, pool13] concat
    x = baseconv(y, p['spp_c2'], 1)
    x = baseconv(x, p['c3'], 1)
    x = baseconv(x, p['c4'], 1)
    return x


def darknet_forward(x_nchw, params, out_features=('dark3', 'dark4', 'dark5')):
    x = jnp.transpose(x_nchw, (0, 2, 3, 1)).astype(jnp.bfloat16)   # NCHW -> NHWC bf16
    outputs = {}
    x = baseconv(x, params['stem_conv'], 1)
    x = apply_group_layer(x, params['stem_group'], 2)
    outputs['stem'] = x
    x = apply_group_layer(x, params['dark2'], 2); outputs['dark2'] = x
    x = apply_group_layer(x, params['dark3'], 2); outputs['dark3'] = x
    x = apply_group_layer(x, params['dark4'], 2); outputs['dark4'] = x
    x = apply_group_layer(x, params['dark5_group'], 2)
    x = apply_spp_block(x, params['dark5_spp'])
    outputs['dark5'] = x
    return {k: jnp.transpose(v.astype(jnp.float32), (0, 3, 1, 2))   # NHWC -> NCHW f32
            for k, v in outputs.items() if k in out_features}


# ------------------------- pure-JAX reference checks ------------------------ #

def _conv_ref(x, w, scale, bias, stride, residual=None):
    xf = x.astype(jnp.float32)
    wf = (w * scale[None, None, None, :]).astype(jnp.bfloat16).astype(jnp.float32)
    k = w.shape[0]
    p = (k - 1) // 2
    y = jax.lax.conv_general_dilated(
        xf, wf, window_strides=(stride, stride), padding=((p, p), (p, p)),
        dimension_numbers=('NHWC', 'HWIO', 'NHWC'))
    y = y + bias[None, None, None, :]
    y = jnp.where(y >= 0, y, LRELU_SLOPE * y)
    if residual is not None:
        y = y + residual.astype(jnp.float32)
    return y


def _spp_ref(x):
    xf = x.astype(jnp.float32)
    outs = [xf]
    for ks in (5, 9, 13):
        p = ks // 2
        xp = jnp.pad(xf, ((0, 0), (p, p), (p, p), (0, 0)), constant_values=-jnp.inf)
        acc = None
        for i in range(ks):
            for j in range(ks):
                win = xp[:, i:i + xf.shape[1], j:j + xf.shape[2], :]
                acc = win if acc is None else jnp.maximum(acc, win)
        outs.append(acc)
    return jnp.concatenate(outs, axis=-1)


if __name__ == "__main__":
    key = jax.random.PRNGKey(0)
    pkey, xkey, ckey = jax.random.split(key, 3)

    # spot-check the Pallas conv / SPP kernels against pure-JAX references
    ck = jax.random.split(ckey, 4)
    for (hh, ww, ci, co, kk, st, use_res) in [
        (12, 12, 8, 16, 3, 1, True),    # 3x3 stride-1 with fused residual
        (12, 12, 8, 16, 3, 2, False),   # 3x3 stride-2 (phase-decomposed path)
        (6, 6, 16, 8, 1, 1, True),      # 1x1
    ]:
        pr = make_baseconv_params(ck[0], ci, co, kk)
        xt = jax.random.normal(ck[1], (2, hh, ww, ci), jnp.float32).astype(jnp.bfloat16)
        p_ = (kk - 1) // 2
        ho_ = (hh + 2 * p_ - kk) // st + 1
        wo_ = (ww + 2 * p_ - kk) // st + 1
        res = (jax.random.normal(ck[2], (2, ho_, wo_, co), jnp.float32)
               .astype(jnp.bfloat16) if use_res else None)
        got = conv_bn_lrelu(xt, pr['w'], pr['scale'], pr['bias'], st, res)
        want = _conv_ref(xt, pr['w'], pr['scale'], pr['bias'], st, res)
        assert got.shape == want.shape
        assert bool(jnp.allclose(got.astype(jnp.float32), want, rtol=2e-2, atol=2e-2)), \
            f"conv check failed (k={kk}, stride={st})"
    xs = jax.random.normal(ck[3], (2, 4, 4, 16), jnp.float32).astype(jnp.bfloat16)
    assert bool(jnp.allclose(spp_pool_concat(xs).astype(jnp.float32), _spp_ref(xs),
                             atol=1e-6)), "spp check failed"

    # full Darknet forward: depth=21, in_channels=3, stem_out_channels=8, input 2x3x64x64
    params = init_darknet(pkey, depth=21, in_channels=3, stem_out=8)
    x = jax.random.normal(xkey, (2, 3, 64, 64), jnp.float32)

    fwd = jax.jit(darknet_forward)
    outs = jax.block_until_ready(fwd(x, params))

    assert set(outs.keys()) == {'dark3', 'dark4', 'dark5'}
    assert outs['dark3'].shape == (2, 64, 8, 8)
    assert outs['dark4'].shape == (2, 128, 4, 4)
    assert outs['dark5'].shape == (2, 128, 2, 2)
    assert all(bool(jnp.all(jnp.isfinite(v))) for v in outs.values())
    print("KERNEL_OK")
</pallas_src>

<mosaic_0001>
module attributes {stable_mosaic.version = 11 : i64} {
  func.func @_conv_tap_kernel(%arg0: i32, %arg1: memref<1x198x8xbf16, #tpu.memory_space<vmem>>, %arg2: memref<9x8x16xbf16, #tpu.memory_space<vmem>>, %arg3: memref<1x16xf32, #tpu.memory_space<vmem>>, %arg4: memref<1x168x16xbf16, #tpu.memory_space<vmem>>, %arg5: memref<1x168x16xbf16, #tpu.memory_space<vmem>>) attributes {dimension_semantics = [#tpu.dimension_semantics<parallel>], iteration_bounds = array<i64: 2>, scalar_prefetch = 0 : i64, scratch_operands = 0 : i64, tpu.core_type = #tpu.core_type<tc>, window_params = [{transform_indices = @transform_0, window_bounds = array<i64: 1, 198, 8>}, {pipeline_mode = #tpu.pipeline_mode<synchronous>, transform_indices = @transform_1, window_bounds = array<i64: 9, 8, 16>}, {pipeline_mode = #tpu.pipeline_mode<synchronous>, transform_indices = @transform_2, window_bounds = array<i64: 1, 16>}, {transform_indices = @transform_3, window_bounds = array<i64: 1, 168, 16>}, {transform_indices = @transform_4, window_bounds = array<i64: 1, 168, 16>}]} {
    %cst = arith.constant 0.000000e+00 : f32
    %0 = vector.broadcast %cst : f32 to vector<168x16xf32>
    %c0 = arith.constant 0 : index
    %c0_0 = arith.constant 0 : index
    %c0_1 = arith.constant 0 : index
    %1 = vector.load %arg1[%c0, %c0_0, %c0_1] : memref<1x198x8xbf16, #tpu.memory_space<vmem>>, vector<1x168x8xbf16>
    %2 = vector.shape_cast %1 : vector<1x168x8xbf16> to vector<168x8xbf16>
    %c0_2 = arith.constant 0 : index
    %c0_3 = arith.constant 0 : index
    %c0_4 = arith.constant 0 : index
    %3 = vector.load %arg2[%c0_2, %c0_3, %c0_4] : memref<9x8x16xbf16, #tpu.memory_space<vmem>>, vector<1x8x16xbf16>
    %4 = vector.shape_cast %3 : vector<1x8x16xbf16> to vector<8x16xbf16>
    %cst_5 = arith.constant dense<0.000000e+00> : vector<168x16xf32>
    %5 = tpu.matmul %2, %4, %cst_5 {dimension_numbers = #tpu.dot_dimension_numbers<[1], [0], [0], [1], [0, 0, 1, 1], [], []>} : vector<168x8xbf16>, vector<8x16xbf16>, vector<168x16xf32> -> vector<168x16xf32>
    %6 = arith.addf %0, %5 : vector<168x16xf32>
    %c0_6 = arith.constant 0 : index
    %c1 = arith.constant 1 : index
    %c0_7 = arith.constant 0 : index
    %7 = vector.load %arg1[%c0_6, %c1, %c0_7] : memref<1x198x8xbf16, #tpu.memory_space<vmem>>, vector<1x168x8xbf16>
    %8 = vector.shape_cast %7 : vector<1x168x8xbf16> to vector<168x8xbf16>
    %c1_8 = arith.constant 1 : index
    %c0_9 = arith.constant 0 : index
    %c0_10 = arith.constant 0 : index
    %9 = vector.load %arg2[%c1_8, %c0_9, %c0_10] : memref<9x8x16xbf16, #tpu.memory_space<vmem>>, vector<1x8x16xbf16>
    %10 = vector.shape_cast %9 : vector<1x8x16xbf16> to vector<8x16xbf16>
    %cst_11 = arith.constant dense<0.000000e+00> : vector<168x16xf32>
    %11 = tpu.matmul %8, %10, %cst_11 {dimension_numbers = #tpu.dot_dimension_numbers<[1], [0], [0], [1], [0, 0, 1, 1], [], []>} : vector<168x8xbf16>, vector<8x16xbf16>, vector<168x16xf32> -> vector<168x16xf32>
    %12 = arith.addf %6, %11 : vector<168x16xf32>
    %c0_12 = arith.constant 0 : index
    %c2 = arith.constant 2 : index
    %c0_13 = arith.constant 0 : index
    %13 = vector.load %arg1[%c0_12, %c2, %c0_13] : memref<1x198x8xbf16, #tpu.memory_space<vmem>>, vector<1x168x8xbf16>
    %14 = vector.shape_cast %13 : vector<1x168x8xbf16> to vector<168x8xbf16>
    %c2_14 = arith.constant 2 : index
    %c0_15 = arith.constant 0 : index
    %c0_16 = arith.constant 0 : index
    %15 = vector.load %arg2[%c2_14, %c0_15, %c0_16] : memref<9x8x16xbf16, #tpu.memory_space<vmem>>, vector<1x8x16xbf16>
    %16 = vector.shape_cast %15 : vector<1x8x16xbf16> to vector<8x16xbf16>
    %cst_17 = arith.constant dense<0.000000e+00> : vector<168x16xf32>
    %17 = tpu.matmul %14, %16, %cst_17 {dimension_numbers = #tpu.dot_dimension_numbers<[1], [0], [0], [1], [0, 0, 1, 1], [], []>} : vector<168x8xbf16>, vector<8x16xbf16>, vector<168x16xf32> -> vector<168x16xf32>
    %18 = arith.addf %12, %17 : vector<168x16xf32>
    %c0_18 = arith.constant 0 : index
    %c14 = arith.constant 14 : index
    %c0_19 = arith.constant 0 : index
    %19 = vector.load %arg1[%c0_18, %c14, %c0_19] : memref<1x198x8xbf16, #tpu.memory_space<vmem>>, vector<1x168x8xbf16>
    %20 = vector.shape_cast %19 : vector<1x168x8xbf16> to vector<168x8xbf16>
    %c3 = arith.constant 3 : index
    %c0_20 = arith.constant 0 : index
    %c0_21 = arith.constant 0 : index
    %21 = vector.load %arg2[%c3, %c0_20, %c0_21] : memref<9x8x16xbf16, #tpu.memory_space<vmem>>, vector<1x8x16xbf16>
    %22 = vector.shape_cast %21 : vector<1x8x16xbf16> to vector<8x16xbf16>
    %cst_22 = arith.constant dense<0.000000e+00> : vector<168x16xf32>
    %23 = tpu.matmul %20, %22, %cst_22 {dimension_numbers = #tpu.dot_dimension_numbers<[1], [0], [0], [1], [0, 0, 1, 1], [], []>} : vector<168x8xbf16>, vector<8x16xbf16>, vector<168x16xf32> -> vector<168x16xf32>
    %24 = arith.addf %18, %23 : vector<168x16xf32>
    %c0_23 = arith.constant 0 : index
    %c15 = arith.constant 15 : index
    %c0_24 = arith.constant 0 : index
    %25 = vector.load %arg1[%c0_23, %c15, %c0_24] : memref<1x198x8xbf16, #tpu.memory_space<vmem>>, vector<1x168x8xbf16>
    %26 = vector.shape_cast %25 : vector<1x168x8xbf16> to vector<168x8xbf16>
    %c4 = arith.constant 4 : index
    %c0_25 = arith.constant 0 : index
    %c0_26 = arith.constant 0 : index
    %27 = vector.load %arg2[%c4, %c0_25, %c0_26] : memref<9x8x16xbf16, #tpu.memory_space<vmem>>, vector<1x8x16xbf16>
    %28 = vector.shape_cast %27 : vector<1x8x16xbf16> to vector<8x16xbf16>
    %cst_27 = arith.constant dense<0.000000e+00> : vector<168x16xf32>
    %29 = tpu.matmul %26, %28, %cst_27 {dimension_numbers = #tpu.dot_dimension_numbers<[1], [0], [0], [1], [0, 0, 1, 1], [], []>} : vector<168x8xbf16>, vector<8x16xbf16>, vector<168x16xf32> -> vector<168x16xf32>
    %30 = arith.addf %24, %29 : vector<168x16xf32>
    %c0_28 = arith.constant 0 : index
    %c16 = arith.constant 16 : index
    %c0_29 = arith.constant 0 : index
    %31 = vector.load %arg1[%c0_28, %c16, %c0_29] : memref<1x198x8xbf16, #tpu.memory_space<vmem>>, vector<1x168x8xbf16>
    %32 = vector.shape_cast %31 : vector<1x168x8xbf16> to vector<168x8xbf16>
    %c5 = arith.constant 5 : index
    %c0_30 = arith.constant 0 : index
    %c0_31 = arith.constant 0 : index
    %33 = vector.load %arg2[%c5, %c0_30, %c0_31] : memref<9x8x16xbf16, #tpu.memory_space<vmem>>, vector<1x8x16xbf16>
    %34 = vector.shape_cast %33 : vector<1x8x16xbf16> to vector<8x16xbf16>
    %cst_32 = arith.constant dense<0.000000e+00> : vector<168x16xf32>
    %35 = tpu.matmul %32, %34, %cst_32 {dimension_numbers = #tpu.dot_dimension_numbers<[1], [0], [0], [1], [0, 0, 1, 1], [], []>} : vector<168x8xbf16>, vector<8x16xbf16>, vector<168x16xf32> -> vector<168x16xf32>
    %36 = arith.addf %30, %35 : vector<168x16xf32>
    %c0_33 = arith.constant 0 : index
    %c28 = arith.constant 28 : index
    %c0_34 = arith.constant 0 : index
    %37 = vector.load %arg1[%c0_33, %c28, %c0_34] : memref<1x198x8xbf16, #tpu.memory_space<vmem>>, vector<1x168x8xbf16>
    %38 = vector.shape_cast %37 : vector<1x168x8xbf16> to vector<168x8xbf16>
    %c6 = arith.constant 6 : index
    %c0_35 = arith.constant 0 : index
    %c0_36 = arith.constant 0 : index
    %39 = vector.load %arg2[%c6, %c0_35, %c0_36] : memref<9x8x16xbf16, #tpu.memory_space<vmem>>, vector<1x8x16xbf16>
    %40 = vector.shape_cast %39 : vector<1x8x16xbf16> to vector<8x16xbf16>
    %cst_37 = arith.constant dense<0.000000e+00> : vector<168x16xf32>
    %41 = tpu.matmul %38, %40, %cst_37 {dimension_numbers = #tpu.dot_dimension_numbers<[1], [0], [0], [1], [0, 0, 1, 1], [], []>} : vector<168x8xbf16>, vector<8x16xbf16>, vector<168x16xf32> -> vector<168x16xf32>
    %42 = arith.addf %36, %41 : vector<168x16xf32>
    %c0_38 = arith.constant 0 : index
    %c29 = arith.constant 29 : index
    %c0_39 = arith.constant 0 : index
    %43 = vector.load %arg1[%c0_38, %c29, %c0_39] : memref<1x198x8xbf16, #tpu.memory_space<vmem>>, vector<1x168x8xbf16>
    %44 = vector.shape_cast %43 : vector<1x168x8xbf16> to vector<168x8xbf16>
    %c7 = arith.constant 7 : index
    %c0_40 = arith.constant 0 : index
    %c0_41 = arith.constant 0 : index
    %45 = vector.load %arg2[%c7, %c0_40, %c0_41] : memref<9x8x16xbf16, #tpu.memory_space<vmem>>, vector<1x8x16xbf16>
    %46 = vector.shape_cast %45 : vector<1x8x16xbf16> to vector<8x16xbf16>
    %cst_42 = arith.constant dense<0.000000e+00> : vector<168x16xf32>
    %47 = tpu.matmul %44, %46, %cst_42 {dimension_numbers = #tpu.dot_dimension_numbers<[1], [0], [0], [1], [0, 0, 1, 1], [], []>} : vector<168x8xbf16>, vector<8x16xbf16>, vector<168x16xf32> -> vector<168x16xf32>
    %48 = arith.addf %42, %47 : vector<168x16xf32>
    %c0_43 = arith.constant 0 : index
    %c30 = arith.constant 30 : index
    %c0_44 = arith.constant 0 : index
    %49 = vector.load %arg1[%c0_43, %c30, %c0_44] : memref<1x198x8xbf16, #tpu.memory_space<vmem>>, vector<1x168x8xbf16>
    %50 = vector.shape_cast %49 : vector<1x168x8xbf16> to vector<168x8xbf16>
    %c8 = arith.constant 8 : index
    %c0_45 = arith.constant 0 : index
    %c0_46 = arith.constant 0 : index
    %51 = vector.load %arg2[%c8, %c0_45, %c0_46] : memref<9x8x16xbf16, #tpu.memory_space<vmem>>, vector<1x8x16xbf16>
    %52 = vector.shape_cast %51 : vector<1x8x16xbf16> to vector<8x16xbf16>
    %cst_47 = arith.constant dense<0.000000e+00> : vector<168x16xf32>
    %53 = tpu.matmul %50, %52, %cst_47 {dimension_numbers = #tpu.dot_dimension_numbers<[1], [0], [0], [1], [0, 0, 1, 1], [], []>} : vector<168x8xbf16>, vector<8x16xbf16>, vector<168x16xf32> -> vector<168x16xf32>
    %54 = arith.addf %48, %53 : vector<168x16xf32>
    %c0_48 = arith.constant 0 : index
    %c0_49 = arith.constant 0 : index
    %55 = vector.load %arg3[%c0_48, %c0_49] : memref<1x16xf32, #tpu.memory_space<vmem>>, vector<1x16xf32>
    %56 = vector.broadcast %55 : vector<1x16xf32> to vector<168x16xf32>
    %57 = arith.addf %54, %56 : vector<168x16xf32>
    %cst_50 = arith.constant 0.000000e+00 : f32
    %58 = vector.broadcast %cst_50 : f32 to vector<168x16xf32>
    %59 = arith.cmpf oge, %57, %58 : vector<168x16xf32>
    %cst_51 = arith.constant 1.000000e-01 : f32
    %60 = vector.broadcast %cst_51 : f32 to vector<168x16xf32>
    %61 = arith.mulf %60, %57 : vector<168x16xf32>
    %62 = arith.select %59, %57, %61 : vector<168x16xi1>, vector<168x16xf32>
    %c0_52 = arith.constant 0 : index
    %c0_53 = arith.constant 0 : index
    %c0_54 = arith.constant 0 : index
    %63 = vector.load %arg4[%c0_52, %c0_53, %c0_54] : memref<1x168x16xbf16, #tpu.memory_space<vmem>>, vector<1x168x16xbf16>
    %64 = vector.shape_cast %63 : vector<1x168x16xbf16> to vector<168x16xbf16>
    %65 = arith.extf %64 : vector<168x16xbf16> to vector<168x16xf32>
    %66 = arith.addf %62, %65 : vector<168x16xf32>
    %67 = vector.shape_cast %66 : vector<168x16xf32> to vector<1x168x16xf32>
    %68 = arith.truncf %67 : vector<1x168x16xf32> to vector<1x168x16xbf16>
    %c0_55 = arith.constant 0 : index
    %c0_56 = arith.constant 0 : index
    %c0_57 = arith.constant 0 : index
    %69 = vector.load %arg5[%c0_55, %c0_56, %c0_57] : memref<1x168x16xbf16, #tpu.memory_space<vmem>>, vector<1x168x16xbf16>
    tpu.vector_store %arg5[%c0_55, %c0_56, %c0_57], %68 {strides = array<i32>} : memref<1x168x16xbf16, #tpu.memory_space<vmem>>, vector<1x168x16xbf16>,
    return
  }
  func.func @transform_0(%arg0: i32) -> (i32, i32, i32) {
    %c0_i32 = arith.constant 0 : i32
    %c0_i32_0 = arith.constant 0 : i32
    %c0_i32_1 = arith.constant 0 : i32
    return %arg0, %c0_i32, %c0_i32_0 : i32, i32, i32
  }
  func.func @transform_1(%arg0: i32) -> (i32, i32, i32) {
    %c0_i32 = arith.constant 0 : i32
    %c0_i32_0 = arith.constant 0 : i32
    %c0_i32_1 = arith.constant 0 : i32
    %c0_i32_2 = arith.constant 0 : i32
    return %c0_i32, %c0_i32_0, %c0_i32_1 : i32, i32, i32
  }
  func.func @transform_2(%arg0: i32) -> (i32, i32) {
    %c0_i32 = arith.constant 0 : i32
    %c0_i32_0 = arith.constant 0 : i32
    %c0_i32_1 = arith.constant 0 : i32
    return %c0_i32, %c0_i32_0 : i32, i32
  }
  func.func @transform_3(%arg0: i32) -> (i32, i32, i32) {
    %c0_i32 = arith.constant 0 : i32
    %c0_i32_0 = arith.constant 0 : i32
    %c0_i32_1 = arith.constant 0 : i32
    return %arg0, %c0_i32, %c0_i32_0 : i32, i32, i32
  }
  func.func @transform_4(%arg0: i32) -> (i32, i32, i32) {
    %c0_i32 = arith.constant 0 : i32
    %c0_i32_0 = arith.constant 0 : i32
    %c0_i32_1 = arith.constant 0 : i32
    return %arg0, %c0_i32, %c0_i32_0 : i32, i32, i32
  }
}

</mosaic_0001>

<llo_original>
// kernel: tpu_custom_call.1
$region0: #{tpu_custom_call.1}
  #allocation0 [shape = 'u32[]', space=smem, size = 0x4, offset = 0x4, fixed_abs, tag = 'smem constant byte address 0x4 - core index']
  #allocation1 [shape = 'u32[144,128]{1,0:T(1,128)}', space=vmem, size = 0x12000, scoped, tag = 'internal scratch']
  %s0 = inlined_call_operand.vmem [shape: bf16[2,198,8], index: 0, kind: input, shape index: {}]
  %s1 = inlined_call_operand.vmem [shape: bf16[9,8,16], index: 1, kind: input, shape index: {}]
  %s2 = inlined_call_operand.vmem [shape: f32[1,16], index: 2, kind: input, shape index: {}]
  %s3 = inlined_call_operand.vmem [shape: bf16[2,168,16], index: 3, kind: input, shape index: {}]
  %s4 = inlined_call_operand.vmem [shape: bf16[2,168,16], index: 4, kind: output, shape index: {}]
  %s5 = sld [smem:[#allocation0]]
  $region49: #{tpu_custom_call.1} parent=0
    _
  %s7 = ssub.s32 1, %s5
  %s8 = scalar_select 0, %s7, %s5
  loop: start=0, step=1, limit=4
  $region2: #{tpu_custom_call.1} parent=0 // loop_pre_header
    _
  $region3: #{tpu_custom_call.1} parent=0 // loop_header
    %s10 = sphi 0, %s14
    %p11 = scmp.ge.s32.totalorder %s10, 4
    %s20 = sphi 0, %s22
    %s23 = sphi 0, %s20
    %s24 = sphi 0, %s23
    %s40 = sphi 0, %s24
    %s44 = sphi 0, %s44
    %s46 = sphi 0, %s44
    %s47 = sphi 0, %s46
    %s61 = sphi 0, %s47
    %s65 = sphi 0, %s65
    %s67 = sphi 0, %s65
    %s68 = sphi 0, %s67
    %s82 = sphi 0, %s68
    %s88 = sphi 0, %s90
    %s91 = sphi 0, %s88
    %s92 = sphi 0, %s91
    %s108 = sphi 0, %s92
    %s114 = sphi 0, %s116
    %s117 = sphi 0, %s114
    %s118 = sphi 0, %s117
    %s134 = sphi 0, %s118
  $region4: #{tpu_custom_call.1} parent=0 // loop_header_branch
    %13 = sbr.rel (%p11) target = $region8
  $region5: #{tpu_custom_call.1} parent=0 // loop_body
    %s15 = ssub.s32 %s10, 1
    %s16 = ssub.s32 %s10, 2
    %s17 = sadd.s32 %s10, 1
    %s18 = ssub.s32 %s10, %s17
    %p19 = scmp.eq.s32.totalorder %s18, 0
    %s21 = sadd.s32 %s20, 1
    %s22 = scalar_select %p19, %s20, %s21
    %p25 = pneg %p19
    %p26 = scmp.eq.s32.totalorder %s10, 1
    %p27 = por %p25, %p26
    %p28 = scmp.ne.s32.totalorder %s20, %s23
    %p29 = scmp.eq.s32.totalorder %s10, 0
    %p30 = por %p28, %p29
    %p31 = scmp.ne.s32.totalorder %s20, %s23
    %p32 = scmp.eq.s32.totalorder %s15, 1
    %p33 = por %p31, %p32
    %p34 = scmp.ne.s32.totalorder %s23, %s24
    %p35 = scmp.eq.s32.totalorder %s15, 0
    %p36 = por %p34, %p35
    %p37 = scmp.ne.s32.totalorder %s23, %s24
    %p38 = scmp.eq.s32.totalorder %s16, 1
    %p39 = por %p37, %p38
    %p41 = scmp.ne.s32.totalorder %s24, %s40
    %p42 = scmp.eq.s32.totalorder %s16, 0
    %p43 = por %p41, %p42
    %s45 = sadd.s32 %s44, 1
    %p48 = scmp.eq.s32.totalorder %s10, 1
    %p49 = scmp.ne.s32.totalorder %s44, %s46
    %p50 = scmp.eq.s32.totalorder %s10, 0
    %p51 = por %p49, %p50
    %p52 = scmp.ne.s32.totalorder %s44, %s46
    %p53 = scmp.eq.s32.totalorder %s15, 1
    %p54 = por %p52, %p53
    %p55 = scmp.ne.s32.totalorder %s46, %s47
    %p56 = scmp.eq.s32.totalorder %s15, 0
    %p57 = por %p55, %p56
    %p58 = scmp.ne.s32.totalorder %s46, %s47
    %p59 = scmp.eq.s32.totalorder %s16, 1
    %p60 = por %p58, %p59
    %p62 = scmp.ne.s32.totalorder %s47, %s61
    %p63 = scmp.eq.s32.totalorder %s16, 0
    %p64 = por %p62, %p63
    %s66 = sadd.s32 %s65, 1
    %p69 = scmp.eq.s32.totalorder %s10, 1
    %p70 = scmp.ne.s32.totalorder %s65, %s67
    %p71 = scmp.eq.s32.totalorder %s10, 0
    %p72 = por %p70, %p71
    %p73 = scmp.ne.s32.totalorder %s65, %s67
    %p74 = scmp.eq.s32.totalorder %s15, 1
    %p75 = por %p73, %p74
    %p76 = scmp.ne.s32.totalorder %s67, %s68
    %p77 = scmp.eq.s32.totalorder %s15, 0
    %p78 = por %p76, %p77
    %p79 = scmp.ne.s32.totalorder %s67, %s68
    %p80 = scmp.eq.s32.totalorder %s16, 1
    %p81 = por %p79, %p80
    %p83 = scmp.ne.s32.totalorder %s68, %s82
    %p84 = scmp.eq.s32.totalorder %s16, 0
    %p85 = por %p83, %p84
    %s86 = ssub.s32 %s10, %s17
    %p87 = scmp.eq.s32.totalorder %s86, 0
    %s89 = sadd.s32 %s88, 1
    %s90 = scalar_select %p87, %s88, %s89
    %p93 = pneg %p87
    %p94 = scmp.eq.s32.totalorder %s10, 1
    %p95 = por %p93, %p94
    %p96 = scmp.ne.s32.totalorder %s88, %s91
    %p97 = scmp.eq.s32.totalorder %s10, 0
    %p98 = por %p96, %p97
    %p99 = scmp.ne.s32.totalorder %s88, %s91
    %p100 = scmp.eq.s32.totalorder %s15, 1
    %p101 = por %p99, %p100
    %p102 = scmp.ne.s32.totalorder %s91, %s92
    %p103 = scmp.eq.s32.totalorder %s15, 0
    %p104 = por %p102, %p103
    %p105 = scmp.ne.s32.totalorder %s91, %s92
    %p106 = scmp.eq.s32.totalorder %s16, 1
    %p107 = por %p105, %p106
    %p109 = scmp.ne.s32.totalorder %s92, %s108
    %p110 = scmp.eq.s32.totalorder %s16, 0
    %p111 = por %p109, %p110
    %s112 = ssub.s32 %s10, %s17
    %p113 = scmp.eq.s32.totalorder %s112, 0
    %s115 = sadd.s32 %s114, 1
    %s116 = scalar_select %p113, %s114, %s115
    %p119 = pneg %p113
    %p120 = scmp.eq.s32.totalorder %s10, 1
    %p121 = por %p119, %p120
    %p122 = scmp.ne.s32.totalorder %s114, %s117
    %p123 = scmp.eq.s32.totalorder %s10, 0
    %p124 = por %p122, %p123
    %p125 = scmp.ne.s32.totalorder %s114, %s117
    %p126 = scmp.eq.s32.totalorder %s15, 1
    %p127 = por %p125, %p126
    %p128 = scmp.ne.s32.totalorder %s117, %s118
    %p129 = scmp.eq.s32.totalorder %s15, 0
    %p130 = por %p128, %p129
    %p131 = scmp.ne.s32.totalorder %s117, %s118
    %p132 = scmp.eq.s32.totalorder %s16, 1
    %p133 = por %p131, %p132
    %p135 = scmp.ne.s32.totalorder %s118, %s134
    %p136 = scmp.eq.s32.totalorder %s16, 0
    %p137 = por %p135, %p136
    %p138 = scmp.le.s32.totalorder 1, %s10
    %p139 = scmp.lt.s32.totalorder %s10, 3
    %p140 = pnand %p138, %p139
    %p141 = pneg %p140
    // Predicated region
    $region9: #{tpu_custom_call.1} parent=5 // pred_check
      _
    $region10: #{tpu_custom_call.1} parent=5 // pred_check_branch
      %143 = sbr.rel (%p140) target = $region12
    $region11: #{tpu_custom_call.1} parent=5 // pred_region
      %s144 = ssub.s32 %s10, 1
      // Predicated region
      $region13: #{tpu_custom_call.1} parent=11 // pred_check
        %p145 = pneg %p57
      $region14: #{tpu_custom_call.1} parent=11 // pred_check_branch
        %147 = sbr.rel (%p145) target = $region16
      $region15: #{tpu_custom_call.1} parent=11 // pred_region
        _
      $region16: #{tpu_custom_call.1} parent=11 // pred_fallthru
        _
      // Predicated region
      $region17: #{tpu_custom_call.1} parent=11 // pred_check
        %p148 = pneg %p78
      $region18: #{tpu_custom_call.1} parent=11 // pred_check_branch
        %150 = sbr.rel (%p148) target = $region20
      $region19: #{tpu_custom_call.1} parent=11 // pred_region
        _
      $region20: #{tpu_custom_call.1} parent=11 // pred_fallthru
        _
    $region12: #{tpu_custom_call.1} parent=5 // pred_fallthru
      _
    %p151 = scmp.lt.s32.totalorder %s10, 2
    // Predicated region
    $region21: #{tpu_custom_call.1} parent=5 // pred_check
      %p152 = pneg %p151
    $region22: #{tpu_custom_call.1} parent=5 // pred_check_branch
      %154 = sbr.rel (%p152) target = $region24
    $region23: #{tpu_custom_call.1} parent=5 // pred_region
      // Predicated region
      $region25: #{tpu_custom_call.1} parent=23 // pred_check
        %p155 = pneg %p30
      $region26: #{tpu_custom_call.1} parent=23 // pred_check_branch
        %157 = sbr.rel (%p155) target = $region28
      $region27: #{tpu_custom_call.1} parent=23 // pred_region
        %p158 = scmp.lt.s32.totalorder %s10, 1
        %s159 = scalar_select %p158, %s10, 1
        %s160 = smul.addr %s159, 25
        %s161 = smul.addr %s160, 4
        %s162 = scalar_lea.vmem %s0, %s161
      $region28: #{tpu_custom_call.1} parent=23 // pred_fallthru
        _
      // Predicated region
      $region29: #{tpu_custom_call.1} parent=23 // pred_check
        %p163 = pneg %p98
      $region30: #{tpu_custom_call.1} parent=23 // pred_check_branch
        %165 = sbr.rel (%p163) target = $region32
      $region31: #{tpu_custom_call.1} parent=23 // pred_region
        %p166 = scmp.lt.s32.totalorder %s10, 1
        %s167 = scalar_select %p166, %s10, 1
        %s168 = smul.addr %s167, 21
        %s169 = smul.addr %s168, 4
        %s170 = scalar_lea.vmem %s3, %s169
      $region32: #{tpu_custom_call.1} parent=23 // pred_fallthru
        _
    $region24: #{tpu_custom_call.1} parent=5 // pred_fallthru
      _
    %p171 = scmp.le.s32.totalorder 1, %s10
    %p172 = scmp.lt.s32.totalorder %s10, 3
    %p173 = pnand %p171, %p172
    %p174 = pneg %p173
    // Predicated region
    $region33: #{tpu_custom_call.1} parent=5 // pred_check
      _
    $region34: #{tpu_custom_call.1} parent=5 // pred_check_branch
      %176 = sbr.rel (%p173) target = $region36
    $region35: #{tpu_custom_call.1} parent=5 // pred_region
      %s177 = ssub.s32 %s10, 1
      %p178 = scmp.lt.s32.totalorder %s15, 1
      %s179 = scalar_select %p178, %s15, 1
      %s180 = smul.addr %s179, 25
      %s181 = smul.addr %s180, 4
      %s182 = scalar_lea.vmem %s0, %s181
      %p183 = pneg %p36
      %p184 = pneg %p33
      %p185 = pneg %p57
      %p186 = pneg %p54
      %p187 = pneg %p78
      %p188 = pneg %p75
      %p189 = scmp.lt.s32.totalorder %s15, 1
      %s190 = scalar_select %p189, %s15, 1
      %s191 = smul.addr %s190, 21
      %s192 = smul.addr %s191, 4
      %s193 = scalar_lea.vmem %s3, %s192
      %p194 = pneg %p104
      %p195 = pneg %p101
      %p196 = pneg %p130
      %p197 = pneg %p127
      %p198 = scmp.lt.s32.totalorder %s15, 1
      %s199 = scalar_select %p198, %s15, 1
      %s200 = smul.addr %s199, 21
      %s201 = smul.addr %s200, 4
      %s202 = scalar_lea.vmem %s4, %s201
      %p203 = scmp.lt.s32.totalorder %s15, 1
      %s204 = scalar_select %p203, %s15, 1
      %s205 = smul.addr %s204, 25
      %s206 = smul.addr %s205, 4
      %s207 = scalar_lea.vmem %s0, %s206
      %p208 = scmp.lt.s32.totalorder %s15, 1
      %s209 = scalar_select %p208, %s15, 1
      %s210 = smul.addr %s209, 21
      %s211 = smul.addr %s210, 4
      %s212 = scalar_lea.vmem %s3, %s211
      %p213 = scmp.lt.s32.totalorder %s15, 1
      %s214 = scalar_select %p213, %s15, 1
      %s215 = smul.addr %s214, 21
      %s216 = smul.addr %s215, 4
      %s217 = scalar_lea.vmem %s4, %s216
      %v219 = vld [vmem:[%s207] sm:$0xf]
      %v220 = vld [vmem:[%s207 + $0x4] sm:$0xf]
      %v221 = vld [vmem:[%s207 + $0x8] sm:$0xf]
      %v222 = vld [vmem:[%s207 + $0xc] sm:$0xf]
      %v223 = vld [vmem:[%s207 + $0x10] sm:$0xf]
      %v224 = vld [vmem:[%s207 + $0x14] sm:$0xf]
      %v225 = vld [vmem:[%s207 + $0x18] sm:$0xf]
      %v226 = vld [vmem:[%s207 + $0x1c] sm:$0xf]
      %v227 = vld [vmem:[%s207 + $0x20] sm:$0xf]
      %v228 = vld [vmem:[%s207 + $0x24] sm:$0xf]
      %v229 = vld [vmem:[%s207 + $0x28] sm:$0xf]
      %v230 = vld [vmem:[%s207 + $0x2c] sm:$0xf]
      %v231 = vld [vmem:[%s207 + $0x30] sm:$0xf]
      %v232 = vld [vmem:[%s207 + $0x34] sm:$0xf]
      %v233 = vld [vmem:[%s207 + $0x38] sm:$0xf]
      %v234 = vld [vmem:[%s207 + $0x3c] sm:$0xf]
      %v235 = vld [vmem:[%s207 + $0x40] sm:$0xf]
      %v236 = vld [vmem:[%s207 + $0x44] sm:$0xf]
      %v237 = vld [vmem:[%s207 + $0x48] sm:$0xf]
      %v238 = vld [vmem:[%s207 + $0x4c] sm:$0xf]
      %v239 = vld [vmem:[%s207 + $0x50] sm:$0xf]
      %v240 = vld [vmem:[%s1] sm:$0xf]
      %v241 = vld [vmem:[%s207 + $0x54] sm:$0x1]
      %s242 = scalar_lea.vmem %s1, 4
      %v243 = vld [vmem:[%s242] sm:$0xf]
      %v266 = vunpack.c.l.b16 %v219
      %v267 = vunpack.c.l.b16 %v220
      %v268 = vunpack.c.l.b16 %v221
      %v269 = vunpack.c.l.b16 %v222
      %v270 = vunpack.c.l.b16 %v223
      %v271 = vunpack.c.l.b16 %v224
      %v272 = vunpack.c.l.b16 %v225
      %v273 = vunpack.c.l.b16 %v226
      %v274 = vunpack.c.l.b16 %v227
      %v275 = vunpack.c.l.b16 %v228
      %v276 = vunpack.c.l.b16 %v229
      %v277 = vunpack.c.l.b16 %v230
      %v278 = vunpack.c.l.b16 %v231
      %v279 = vunpack.c.l.b16 %v232
      %v280 = vunpack.c.l.b16 %v233
      %v281 = vunpack.c.l.b16 %v234
      %v282 = vunpack.c.l.b16 %v235
      %v283 = vunpack.c.l.b16 %v236
      %v284 = vunpack.c.l.b16 %v237
      %v285 = vunpack.c.l.b16 %v238
      %v286 = vunpack.c.l.b16 %v239
      %v287 = vunpack.c.l.b16 %v241
      %v288 = vpack.c.b16 %v267, %v266
      %v289 = vpack.c.b16 %v269, %v268
      %v290 = vpack.c.b16 %v271, %v270
      %v291 = vpack.c.b16 %v273, %v272
      %v292 = vpack.c.b16 %v275, %v274
      %v293 = vpack.c.b16 %v277, %v276
      %v294 = vpack.c.b16 %v279, %v278
      %v295 = vpack.c.b16 %v281, %v280
      %v296 = vpack.c.b16 %v283, %v282
      %v297 = vpack.c.b16 %v285, %v284
      %v298 = vpack.c.b16 %v287, %v286
      %vm299 = vsmask.f32 7424
      %v301 = vshrl.u32 %v288, 16
      %v303 = vshll.u32 %v288, 16
      %v305 = vrot.slane %v303, 1
      %v306 = vor.u32 %v301, %v305
      %v308 = vshll.u32 %v289, 16
      %v310 = vrot.slane %v308, 1
      %v311 = vsel %vm299, %v306, %v310
      %v312 = vshrl.u32 %v289, 16
      %v314 = vor.u32 %v312, %v310
      %v316 = vshll.u32 %v290, 16
      %v318 = vrot.slane %v316, 1
      %v319 = vsel %vm299, %v314, %v318
      %v320 = vshrl.u32 %v290, 16
      %v322 = vor.u32 %v320, %v318
      %v324 = vshll.u32 %v291, 16
      %v326 = vrot.slane %v324, 1
      %v327 = vsel %vm299, %v322, %v326
      %v328 = vshrl.u32 %v291, 16
      %v330 = vor.u32 %v328, %v326
      %v332 = vshll.u32 %v292, 16
      %v334 = vrot.slane %v332, 1
      %v335 = vsel %vm299, %v330, %v334
      %v336 = vshrl.u32 %v292, 16
      %v338 = vor.u32 %v336, %v334
      %v340 = vshll.u32 %v293, 16
      %v342 = vrot.slane %v340, 1
      %v343 = vsel %vm299, %v338, %v342
      %v344 = vshrl.u32 %v293, 16
      %v346 = vor.u32 %v344, %v342
      %v348 = vshll.u32 %v294, 16
      %v350 = vrot.slane %v348, 1
      %v351 = vsel %vm299, %v346, %v350
      %v352 = vshrl.u32 %v294, 16
      %v354 = vor.u32 %v352, %v350
      %v356 = vshll.u32 %v295, 16
      %v358 = vrot.slane %v356, 1
      %v359 = vsel %vm299, %v354, %v358
      %v360 = vshrl.u32 %v295, 16
      %v362 = vor.u32 %v360, %v358
      %v364 = vshll.u32 %v296, 16
      %v366 = vrot.slane %v364, 1
      %v367 = vsel %vm299, %v362, %v366
      %v368 = vshrl.u32 %v296, 16
      %v370 = vor.u32 %v368, %v366
      %v372 = vshll.u32 %v297, 16
      %v374 = vrot.slane %v372, 1
      %v375 = vsel %vm299, %v370, %v374
      %v376 = vshrl.u32 %v297, 16
      %v378 = vor.u32 %v376, %v374
      %v380 = vshll.u32 %v298, 16
      %v382 = vrot.slane %v380, 1
      %v383 = vsel %vm299, %v378, %v382
      %v384 = vshrl.u32 %v298, 16
      %v386 = vor.u32 %v384, %v382
      %vm387 = vcmask 64512
      %v389 = vsel %vm387, %v311, 0
      %v392 = vsel %vm387, %v319, 0
      %v395 = vsel %vm387, %v327, 0
      %v398 = vsel %vm387, %v335, 0
      %v401 = vsel %vm387, %v343, 0
      %v404 = vsel %vm387, %v351, 0
      %v407 = vsel %vm387, %v359, 0
      %v410 = vsel %vm387, %v367, 0
      %v413 = vsel %vm387, %v375, 0
      %v416 = vsel %vm387, %v383, 0
      %v419 = vsel %vm387, %v386, 0
      %vm421 = vcmask 1043456
      %v423 = vsel %vm421, %v243, 0
      %425 = vmatprep.subr.bf16.mxu0 0
      %426 = vmatpush1.bf16.msra.mxu0 %v423
      %427 = vmatprep.subr.bf16.mxu0 0
      %428 = vmatpush1.bf16.msra.mxu0 0
      %429 = vmatprep.subr.bf16.mxu0 0
      %430 = vmatpush1.bf16.msra.mxu0 0
      %431 = vmatprep.subr.bf16.mxu0 0
      %432 = vmatpush1.bf16.msra.mxu0 0
      %433 = vmatprep.subr.bf16.mxu0 0
      %434 = vmatpush1.bf16.msra.mxu0 0
      %435 = vmatprep.subr.bf16.mxu0 0
      %436 = vmatpush1.bf16.msra.mxu0 0
      %437 = vmatprep.subr.bf16.mxu0 0
      %438 = vmatpush1.bf16.msra.mxu0 0
      %439 = vmatprep.subr.bf16.mxu0 0
      %440 = vmatpush1.bf16.msra.mxu0 0
      %441 = vmatprep.subr.bf16.mxu0 0
      %442 = vmatpush1.bf16.msra.mxu0 0
      %443 = vmatprep.subr.bf16.mxu0 0
      %444 = vmatpush1.bf16.msra.mxu0 0
      %445 = vmatprep.subr.bf16.mxu0 0
      %446 = vmatpush1.bf16.msra.mxu0 0
      %447 = vmatprep.subr.bf16.mxu0 0
      %448 = vmatpush1.bf16.msra.mxu0 0
      %449 = vmatprep.subr.bf16.mxu0 0
      %450 = vmatpush1.bf16.msra.mxu0 0
      %451 = vmatprep.subr.bf16.mxu0 0
      %452 = vmatpush1.bf16.msra.mxu0 0
      %453 = vmatprep.subr.bf16.mxu0 0
      %454 = vmatpush1.bf16.msra.mxu0 0
      %455 = vmatprep.subr.bf16.mxu0 0
      %456 = vmatpush1.bf16.msra.mxu0 0
      %457 = vmatprep.mubr.bf16.mxu0 0
      %458 = vmatmul.mubr.bf16.gmra.mrb[0].mxu0 %v389
      %v459 = vpop.f32.mrb[0].mxu0
      %v460 = vadd.f32 0.0, %v459
      %v461 = vpop.f32.mrb[0].mxu0
      %v462 = vpop.f32.mrb[0].mxu0
      %v463 = vadd.f32 0.0, %v462
      %v464 = vpop.f32.mrb[0].mxu0
      %465 = vmatprep.mubr.bf16.mxu0 0
      %466 = vmatmul.mubr.bf16.gmra.mrb[0].mxu0 %v392
      %v467 = vpop.f32.mrb[0].mxu0
      %v468 = vadd.f32 0.0, %v467
      %v469 = vpop.f32.mrb[0].mxu0
      %v470 = vpop.f32.mrb[0].mxu0
      %v471 = vadd.f32 0.0, %v470
      %v472 = vpop.f32.mrb[0].mxu0
      %473 = vmatprep.mubr.bf16.mxu0 0
      %474 = vmatmul.mubr.bf16.gmra.mrb[0].mxu0 %v395
      %v475 = vpop.f32.mrb[0].mxu0
      %v476 = vadd.f32 0.0, %v475
      %v477 = vpop.f32.mrb[0].mxu0
      %v478 = vpop.f32.mrb[0].mxu0
      %v479 = vadd.f32 0.0, %v478
      %v480 = vpop.f32.mrb[0].mxu0
      %481 = vmatprep.mubr.bf16.mxu0 0
      %482 = vmatmul.mubr.bf16.gmra.mrb[0].mxu0 %v398
      %v483 = vpop.f32.mrb[0].mxu0
      %v484 = vadd.f32 0.0, %v483
      %v485 = vpop.f32.mrb[0].mxu0
      %v486 = vpop.f32.mrb[0].mxu0
      %v487 = vadd.f32 0.0, %v486
      %v488 = vpop.f32.mrb[0].mxu0
      %489 = vmatprep.mubr.bf16.mxu0 0
      %490 = vmatmul.mubr.bf16.gmra.mrb[0].mxu0 %v401
      %v491 = vpop.f32.mrb[0].mxu0
      %v492 = vadd.f32 0.0, %v491
      %v493 = vpop.f32.mrb[0].mxu0
      %v494 = vpop.f32.mrb[0].mxu0
      %v495 = vadd.f32 0.0, %v494
      %v496 = vpop.f32.mrb[0].mxu0
      %497 = vmatprep.mubr.bf16.mxu0 0
      %498 = vmatmul.mubr.bf16.gmra.mrb[0].mxu0 %v404
      %v499 = vpop.f32.mrb[0].mxu0
      %v500 = vadd.f32 0.0, %v499
      %v501 = vpop.f32.mrb[0].mxu0
      %v502 = vpop.f32.mrb[0].mxu0
      %v503 = vadd.f32 0.0, %v502
      %v504 = vpop.f32.mrb[0].mxu0
      %505 = vmatprep.mubr.bf16.mxu0 0
      %506 = vmatmul.mubr.bf16.gmra.mrb[0].mxu0 %v407
      %v507 = vpop.f32.mrb[0].mxu0
      %v508 = vadd.f32 0.0, %v507
      %v509 = vpop.f32.mrb[0].mxu0
      %v510 = vpop.f32.mrb[0].mxu0
      %v511 = vadd.f32 0.0, %v510
      %v512 = vpop.f32.mrb[0].mxu0
      %513 = vmatprep.mubr.bf16.mxu0 0
      %514 = vmatmul.mubr.bf16.gmra.mrb[0].mxu0 %v410
      %v515 = vpop.f32.mrb[0].mxu0
      %v516 = vadd.f32 0.0, %v515
      %v517 = vpop.f32.mrb[0].mxu0
      %v518 = vpop.f32.mrb[0].mxu0
      %v519 = vadd.f32 0.0, %v518
      %v520 = vpop.f32.mrb[0].mxu0
      %521 = vmatprep.mubr.bf16.mxu0 0
      %522 = vmatmul.mubr.bf16.gmra.mrb[0].mxu0 %v413
      %v523 = vpop.f32.mrb[0].mxu0
      %v524 = vadd.f32 0.0, %v523
      %v525 = vpop.f32.mrb[0].mxu0
      %v526 = vpop.f32.mrb[0].mxu0
      %v527 = vadd.f32 0.0, %v526
      %v528 = vpop.f32.mrb[0].mxu0
      %529 = vmatprep.mubr.bf16.mxu0 0
      %530 = vmatmul.mubr.bf16.gmra.mrb[0].mxu0 %v416
      %v531 = vpop.f32.mrb[0].mxu0
      %v532 = vadd.f32 0.0, %v531
      %v533 = vpop.f32.mrb[0].mxu0
      %v534 = vpop.f32.mrb[0].mxu0
      %v535 = vadd.f32 0.0, %v534
      %v536 = vpop.f32.mrb[0].mxu0
      %537 = vmatprep.mubr.bf16.mxu0 0
      %538 = vmatmul.mubr.bf16.gmra.mrb[0].mxu0 %v419
      %v539 = vpop.f32.mrb[0].mxu0
      %v540 = vadd.f32 0.0, %v539
      %v541 = vpop.f32.mrb[0].mxu0
      %v542 = vpop.f32.mrb[0].mxu0
      %v543 = vpop.f32.mrb[0].mxu0
      %544 = vdwg.mxu0
      %v545 = vpack.c.b16 %v286, %v286
      %v546 = vsel %vm387, %v288, 0
      %v548 = vsel %vm387, %v289, 0
      %v550 = vsel %vm387, %v290, 0
      %v552 = vsel %vm387, %v291, 0
      %v554 = vsel %vm387, %v292, 0
      %v556 = vsel %vm387, %v293, 0
      %v558 = vsel %vm387, %v294, 0
      %v560 = vsel %vm387, %v295, 0
      %v562 = vsel %vm387, %v296, 0
      %v564 = vsel %vm387, %v297, 0
      %v567 = vsel %vm387, %v545, 0
      %v570 = vsel %vm421, %v240, 0
      %572 = vmatprep.subr.bf16.mxu0 0
      %573 = vmatpush1.bf16.msra.mxu0 %v570
      %574 = vmatprep.subr.bf16.mxu0 0
      %575 = vmatpush1.bf16.msra.mxu0 0
      %576 = vmatprep.subr.bf16.mxu0 0
      %577 = vmatpush1.bf16.msra.mxu0 0
      %578 = vmatprep.subr.bf16.mxu0 0
      %579 = vmatpush1.bf16.msra.mxu0 0
      %580 = vmatprep.subr.bf16.mxu0 0
      %581 = vmatpush1.bf16.msra.mxu0 0
      %582 = vmatprep.subr.bf16.mxu0 0
      %583 = vmatpush1.bf16.msra.mxu0 0
      %584 = vmatprep.subr.bf16.mxu0 0
      %585 = vmatpush1.bf16.msra.mxu0 0
      %586 = vmatprep.subr.bf16.mxu0 0
      %587 = vmatpush1.bf16.msra.mxu0 0
      %588 = vmatprep.subr.bf16.mxu0 0
      %589 = vmatpush1.bf16.msra.mxu0 0
      %590 = vmatprep.subr.bf16.mxu0 0
      %591 = vmatpush1.bf16.msra.mxu0 0
      %592 = vmatprep.subr.bf16.mxu0 0
      %593 = vmatpush1.bf16.msra.mxu0 0
      %594 = vmatprep.subr.bf16.mxu0 0
      %595 = vmatpush1.bf16.msra.mxu0 0
      %596 = vmatprep.subr.bf16.mxu0 0
      %597 = vmatpush1.bf16.msra.mxu0 0
      %598 = vmatprep.subr.bf16.mxu0 0
      %599 = vmatpush1.bf16.msra.mxu0 0
      %600 = vmatprep.subr.bf16.mxu0 0
      %601 = vmatpush1.bf16.msra.mxu0 0
      %602 = vmatprep.subr.bf16.mxu0 0
      %603 = vmatpush1.bf16.msra.mxu0 0
      %604 = vmatprep.mubr.bf16.mxu0 0
      %605 = vmatmul.mubr.bf16.gmra.mrb[0].mxu0 %v546
      %v606 = vpop.f32.mrb[0].mxu0
      %v607 = vadd.f32 %v460, %v606
      %v608 = vpop.f32.mrb[0].mxu0
      %v609 = vpop.f32.mrb[0].mxu0
      %v610 = vadd.f32 %v463, %v609
      %v611 = vpop.f32.mrb[0].mxu0
      %612 = vmatprep.mubr.bf16.mxu0 0
      %613 = vmatmul.mubr.bf16.gmra.mrb[0].mxu0 %v548
      %v614 = vpop.f32.mrb[0].mxu0
      %v615 = vadd.f32 %v468, %v614
      %v616 = vpop.f32.mrb[0].mxu0
      %v617 = vpop.f32.mrb[0].mxu0
      %v618 = vadd.f32 %v471, %v617
      %v619 = vpop.f32.mrb[0].mxu0
      %620 = vmatprep.mubr.bf16.mxu0 0
      %621 = vmatmul.mubr.bf16.gmra.mrb[0].mxu0 %v550
      %v622 = vpop.f32.mrb[0].mxu0
      %v623 = vadd.f32 %v476, %v622
      %v624 = vpop.f32.mrb[0].mxu0
      %v625 = vpop.f32.mrb[0].mxu0
      %v626 = vadd.f32 %v479, %v625
      %v627 = vpop.f32.mrb[0].mxu0
      %628 = vmatprep.mubr.bf16.mxu0 0
      %629 = vmatmul.mubr.bf16.gmra.mrb[0].mxu0 %v552
      %v630 = vpop.f32.mrb[0].mxu0
      %v631 = vadd.f32 %v484, %v630
      %v632 = vpop.f32.mrb[0].mxu0
      %v633 = vpop.f32.mrb[0].mxu0
      %v634 = vadd.f32 %v487, %v633
      %v635 = vpop.f32.mrb[0].mxu0
      %636 = vmatprep.mubr.bf16.mxu0 0
      %637 = vmatmul.mubr.bf16.gmra.mrb[0].mxu0 %v554
      %v638 = vpop.f32.mrb[0].mxu0
      %v639 = vadd.f32 %v492, %v638
      %v640 = vpop.f32.mrb[0].mxu0
      %v641 = vpop.f32.mrb[0].mxu0
      %v642 = vadd.f32 %v495, %v641
      %v643 = vpop.f32.mrb[0].mxu0
      %644 = vmatprep.mubr.bf16.mxu0 0
      %645 = vmatmul.mubr.bf16.gmra.mrb[0].mxu0 %v556
      %v646 = vpop.f32.mrb[0].mxu0
      %v647 = vadd.f32 %v500, %v646
      %v648 = vpop.f32.mrb[0].mxu0
      %v649 = vpop.f32.mrb[0].mxu0
      %v650 = vadd.f32 %v503, %v649
      %v651 = vpop.f32.mrb[0].mxu0
      %652 = vmatprep.mubr.bf16.mxu0 0
      %653 = vmatmul.mubr.bf16.gmra.mrb[0].mxu0 %v558
      %v654 = vpop.f32.mrb[0].mxu0
      %v655 = vadd.f32 %v508, %v654
      %v656 = vpop.f32.mrb[0].mxu0
      %v657 = vpop.f32.mrb[0].mxu0
      %v658 = vadd.f32 %v511, %v657
      %v659 = vpop.f32.mrb[0].mxu0
      %660 = vmatprep.mubr.bf16.mxu0 0
      %661 = vmatmul.mubr.bf16.gmra.mrb[0].mxu0 %v560
      %v662 = vpop.f32.mrb[0].mxu0
      %v663 = vadd.f32 %v516, %v662
      %v664 = vpop.f32.mrb[0].mxu0
      %v665 = vpop.f32.mrb[0].mxu0
      %v666 = vadd.f32 %v519, %v665
      %v667 = vpop.f32.mrb[0].mxu0
      %668 = vmatprep.mubr.bf16.mxu0 0
      %669 = vmatmul.mubr.bf16.gmra.mrb[0].mxu0 %v562
      %v670 = vpop.f32.mrb[0].mxu0
      %v671 = vadd.f32 %v524, %v670
      %v672 = vpop.f32.mrb[0].mxu0
      %v673 = vpop.f32.mrb[0].mxu0
      %v674 = vadd.f32 %v527, %v673
      %v675 = vpop.f32.mrb[0].mxu0
      %676 = vmatprep.mubr.bf16.mxu0 0
      %677 = vmatmul.mubr.bf16.gmra.mrb[0].mxu0 %v564
      %v678 = vpop.f32.mrb[0].mxu0
      %v679 = vadd.f32 %v532, %v678
      %v680 = vpop.f32.mrb[0].mxu0
      %v681 = vpop.f32.mrb[0].mxu0
      %v682 = vadd.f32 %v535, %v681
      %v683 = vpop.f32.mrb[0].mxu0
      %684 = vmatprep.mubr.bf16.mxu0 0
      %685 = vmatmul.mubr.bf16.gmra.mrb[0].mxu0 %v567
      %v686 = vpop.f32.mrb[0].mxu0
      %v687 = vadd.f32 %v540, %v686
      %v688 = vpop.f32.mrb[0].mxu0
      %v689 = vpop.f32.mrb[0].mxu0
      %v690 = vpop.f32.mrb[0].mxu0
      %691 = vdwg.mxu0
      %v692 = vld [vmem:[%s207] sm:$0xe]
      %s693 = scalar_lea.vmem %s1, 8
      %v694 = vld [vmem:[%s693] sm:$0xf]
      %v696 = vunpack.c.l.b16 %v692
      %v697 = vpack.c.b16 %v267, %v696
      %vm698 = vcmask 1046528
      %v699 = vrot.slane %v697, 1
      %v700 = vrot.slane %v289, 1
      %v701 = vsel %vm698, %v699, %v700
      %v702 = vrot.slane %v290, 1
      %v703 = vsel %vm698, %v700, %v702
      %v704 = vrot.slane %v291, 1
      %v705 = vsel %vm698, %v702, %v704
      %v706 = vrot.slane %v292, 1
      %v707 = vsel %vm698, %v704, %v706
      %v708 = vrot.slane %v293, 1
      %v709 = vsel %vm698, %v706, %v708
      %v710 = vrot.slane %v294, 1
      %v711 = vsel %vm698, %v708, %v710
      %v712 = vrot.slane %v295, 1
      %v713 = vsel %vm698, %v710, %v712
      %v714 = vrot.slane %v296, 1
      %v715 = vsel %vm698, %v712, %v714
      %v716 = vrot.slane %v297, 1
      %v717 = vsel %vm698, %v714, %v716
      %v718 = vrot.slane %v298, 1
      %v719 = vsel %vm698, %v716, %v718
      %v721 = vsel %vm387, %v701, 0
      %v724 = vsel %vm387, %v703, 0
      %v727 = vsel %vm387, %v705, 0
      %v730 = vsel %vm387, %v707, 0
      %v733 = vsel %vm387, %v709, 0
      %v736 = vsel %vm387, %v711, 0
      %v739 = vsel %vm387, %v713, 0
      %v742 = vsel %vm387, %v715, 0
      %v745 = vsel %vm387, %v717, 0
      %v748 = vsel %vm387, %v719, 0
      %v751 = vsel %vm387, %v718, 0
      %v754 = vsel %vm421, %v694, 0
      %756 = vmatprep.subr.bf16.mxu0 0
      %757 = vmatpush1.bf16.msra.mxu0 %v754
      %758 = vmatprep.subr.bf16.mxu0 0
      %759 = vmatpush1.bf16.msra.mxu0 0
      %760 = vmatprep.subr.bf16.mxu0 0
      %761 = vmatpush1.bf16.msra.mxu0 0
      %762 = vmatprep.subr.bf16.mxu0 0
      %763 = vmatpush1.bf16.msra.mxu0 0
      %764 = vmatprep.subr.bf16.mxu0 0
      %765 = vmatpush1.bf16.msra.mxu0 0
      %766 = vmatprep.subr.bf16.mxu0 0
      %767 = vmatpush1.bf16.msra.mxu0 0
      %768 = vmatprep.subr.bf16.mxu0 0
      %769 = vmatpush1.bf16.msra.mxu0 0
      %770 = vmatprep.subr.bf16.mxu0 0
      %771 = vmatpush1.bf16.msra.mxu0 0
      %772 = vmatprep.subr.bf16.mxu0 0
      %773 = vmatpush1.bf16.msra.mxu0 0
      %774 = vmatprep.subr.bf16.mxu0 0
      %775 = vmatpush1.bf16.msra.mxu0 0
      %776 = vmatprep.subr.bf16.mxu0 0
      %777 = vmatpush1.bf16.msra.mxu0 0
      %778 = vmatprep.subr.bf16.mxu0 0
      %779 = vmatpush1.bf16.msra.mxu0 0
      %780 = vmatprep.subr.bf16.mxu0 0
      %781 = vmatpush1.bf16.msra.mxu0 0
      %782 = vmatprep.subr.bf16.mxu0 0
      %783 = vmatpush1.bf16.msra.mxu0 0
      %784 = vmatprep.subr.bf16.mxu0 0
      %785 = vmatpush1.bf16.msra.mxu0 0
      %786 = vmatprep.subr.bf16.mxu0 0
      %787 = vmatpush1.bf16.msra.mxu0 0
      %788 = vmatprep.mubr.bf16.mxu0 0
      %789 = vmatmul.mubr.bf16.gmra.mrb[0].mxu0 %v721
      %v790 = vpop.f32.mrb[0].mxu0
      %v791 = vadd.f32 0.0, %v790
      %v792 = vpop.f32.mrb[0].mxu0
      %v793 = vpop.f32.mrb[0].mxu0
      %v794 = vadd.f32 0.0, %v793
      %v795 = vpop.f32.mrb[0].mxu0
      %796 = vmatprep.mubr.bf16.mxu0 0
      %797 = vmatmul.mubr.bf16.gmra.mrb[0].mxu0 %v724
      %v798 = vpop.f32.mrb[0].mxu0
      %v799 = vadd.f32 0.0, %v798
      %v800 = vpop.f32.mrb[0].mxu0
      %v801 = vpop.f32.mrb[0].mxu0
      %v802 = vadd.f32 0.0, %v801
      %v803 = vpop.f32.mrb[0].mxu0
      %804 = vmatprep.mubr.bf16.mxu0 0
      %805 = vmatmul.mubr.bf16.gmra.mrb[0].mxu0 %v727
      %v806 = vpop.f32.mrb[0].mxu0
      %v807 = vadd.f32 0.0, %v806
      %v808 = vpop.f32.mrb[0].mxu0
      %v809 = vpop.f32.mrb[0].mxu0
      %v810 = vadd.f32 0.0, %v809
      %v811 = vpop.f32.mrb[0].mxu0
      %812 = vmatprep.mubr.bf16.mxu0 0
      %813 = vmatmul.mubr.bf16.gmra.mrb[0].mxu0 %v730
      %v814 = vpop.f32.mrb[0].mxu0
      %v815 = vadd.f32 0.0, %v814
      %v816 = vpop.f32.mrb[0].mxu0
      %v817 = vpop.f32.mrb[0].mxu0
      %v818 = vadd.f32 0.0, %v817
      %v819 = vpop.f32.mrb[0].mxu0
      %820 = vmatprep.mubr.bf16.mxu0 0
      %821 = vmatmul.mubr.bf16.gmra.mrb[0].mxu0 %v733
      %v822 = vpop.f32.mrb[0].mxu0
      %v823 = vadd.f32 0.0, %v822
      %v824 = vpop.f32.mrb[0].mxu0
      %v825 = vpop.f32.mrb[0].mxu0
      %v826 = vadd.f32 0.0, %v825
      %v827 = vpop.f32.mrb[0].mxu0
      %828 = vmatprep.mubr.bf16.mxu0 0
      %829 = vmatmul.mubr.bf16.gmra.mrb[0].mxu0 %v736
      %v830 = vpop.f32.mrb[0].mxu0
      %v831 = vadd.f32 0.0, %v830
      %v832 = vpop.f32.mrb[0].mxu0
      %v833 = vpop.f32.mrb[0].mxu0
      %v834 = vadd.f32 0.0, %v833
      %v835 = vpop.f32.mrb[0].mxu0
      %836 = vmatprep.mubr.bf16.mxu0 0
      %837 = vmatmul.mubr.bf16.gmra.mrb[0].mxu0 %v739
      %v838 = vpop.f32.mrb[0].mxu0
      %v839 = vadd.f32 0.0, %v838
      %v840 = vpop.f32.mrb[0].mxu0
      %v841 = vpop.f32.mrb[0].mxu0
      %v842 = vadd.f32 0.0, %v841
      %v843 = vpop.f32.mrb[0].mxu0
      %844 = vmatprep.mubr.bf16.mxu0 0
      %845 = vmatmul.mubr.bf16.gmra.mrb[0].mxu0 %v742
      %v846 = vpop.f32.mrb[0].mxu0
      %v847 = vadd.f32 0.0, %v846
      %v848 = vpop.f32.mrb[0].mxu0
      %v849 = vpop.f32.mrb[0].mxu0
      %v850 = vadd.f32 0.0, %v849
      %v851 = vpop.f32.mrb[0].mxu0
      %852 = vmatprep.mubr.bf16.mxu0 0
      %853 = vmatmul.mubr.bf16.gmra.mrb[0].mxu0 %v745
      %v854 = vpop.f32.mrb[0].mxu0
      %v855 = vadd.f32 0.0, %v854
      %v856 = vpop.f32.mrb[0].mxu0
      %v857 = vpop.f32.mrb[0].mxu0
      %v858 = vadd.f32 0.0, %v857
      %v859 = vpop.f32.mrb[0].mxu0
      %860 = vmatprep.mubr.bf16.mxu0 0
      %861 = vmatmul.mubr.bf16.gmra.mrb[0].mxu0 %v748
      %v862 = vpop.f32.mrb[0].mxu0
      %v863 = vadd.f32 0.0, %v862
      %v864 = vpop.f32.mrb[0].mxu0
      %v865 = vpop.f32.mrb[0].mxu0
      %v866 = vadd.f32 0.0, %v865
      %v867 = vpop.f32.mrb[0].mxu0
      %868 = vmatprep.mubr.bf16.mxu0 0
      %869 = vmatmul.mubr.bf16.gmra.mrb[0].mxu0 %v751
      %v870 = vpop.f32.mrb[0].mxu0
      %v871 = vadd.f32 0.0, %v870
      %v872 = vpop.f32.mrb[0].mxu0
      %v873 = vpop.f32.mrb[0].mxu0
      %v874 = vpop.f32.mrb[0].mxu0
      %875 = vdwg.mxu0
      %v876 = vadd.f32 %v607, %v791
      %v877 = vadd.f32 %v610, %v794
      %v878 = vadd.f32 %v615, %v799
      %v879 = vadd.f32 %v618, %v802
      %v880 = vadd.f32 %v623, %v807
      %v881 = vadd.f32 %v626, %v810
      %v882 = vadd.f32 %v631, %v815
      %v883 = vadd.f32 %v634, %v818
      %v884 = vadd.f32 %v639, %v823
      %v885 = vadd.f32 %v642, %v826
      %v886 = vadd.f32 %v647, %v831
      %v887 = vadd.f32 %v650, %v834
      %v888 = vadd.f32 %v655, %v839
      %v889 = vadd.f32 %v658, %v842
      %v890 = vadd.f32 %v663, %v847
      %v891 = vadd.f32 %v666, %v850
      %v892 = vadd.f32 %v671, %v855
      %v893 = vadd.f32 %v674, %v858
      %v894 = vadd.f32 %v679, %v863
      %v895 = vadd.f32 %v682, %v866
      %v896 = vadd.f32 %v687, %v871
      %v897 = vld [vmem:[%s207 + $0x4] sm:$0x8]
      %v898 = vld [vmem:[%s207 + $0x8] sm:$0xf]
      %v899 = vld [vmem:[%s207 + $0xc] sm:$0xf]
      %v900 = vld [vmem:[%s207 + $0x10] sm:$0xf]
      %v901 = vld [vmem:[%s207 + $0x14] sm:$0xf]
      %v902 = vld [vmem:[%s207 + $0x18] sm:$0xf]
      %v903 = vld [vmem:[%s207 + $0x1c] sm:$0xf]
      %v904 = vld [vmem:[%s207 + $0x20] sm:$0xf]
      %v905 = vld [vmem:[%s207 + $0x24] sm:$0xf]
      %v906 = vld [vmem:[%s207 + $0x28] sm:$0xf]
      %v907 = vld [vmem:[%s207 + $0x2c] sm:$0xf]
      %v908 = vld [vmem:[%s207 + $0x30] sm:$0xf]
      %v909 = vld [vmem:[%s207 + $0x34] sm:$0xf]
      %v910 = vld [vmem:[%s207 + $0x38] sm:$0xf]
      %v911 = vld [vmem:[%s207 + $0x3c] sm:$0xf]
      %v912 = vld [vmem:[%s207 + $0x40] sm:$0xf]
      %v913 = vld [vmem:[%s207 + $0x44] sm:$0xf]
      %v914 = vld [vmem:[%s207 + $0x48] sm:$0xf]
      %v915 = vld [vmem:[%s207 + $0x4c] sm:$0xf]
      %v916 = vld [vmem:[%s207 + $0x50] sm:$0xf]
      %v917 = vld [vmem:[%s207 + $0x54] sm:$0xf]
      %v918 = vld [vmem:[%s207 + $0x58] sm:$0x7]
      %s919 = scalar_lea.vmem %s1, 12
      %v920 = vld [vmem:[%s919] sm:$0xf]
      %v943 = vunpack.c.l.b16 %v897
      %v944 = vunpack.c.l.b16 %v898
      %v945 = vunpack.c.l.b16 %v899
      %v946 = vunpack.c.l.b16 %v900
      %v947 = vunpack.c.l.b16 %v901
      %v948 = vunpack.c.l.b16 %v902
      %v949 = vunpack.c.l.b16 %v903
      %v950 = vunpack.c.l.b16 %v904
      %v951 = vunpack.c.l.b16 %v905
      %v952 = vunpack.c.l.b16 %v906
      %v953 = vunpack.c.l.b16 %v907
      %v954 = vunpack.c.l.b16 %v908
      %v955 = vunpack.c.l.b16 %v909
      %v956 = vunpack.c.l.b16 %v910
      %v957 = vunpack.c.l.b16 %v911
      %v958 = vunpack.c.l.b16 %v912
      %v959 = vunpack.c.l.b16 %v913
      %v960 = vunpack.c.l.b16 %v914
      %v961 = vunpack.c.l.b16 %v915
      %v962 = vunpack.c.l.b16 %v916
      %v963 = vunpack.c.l.b16 %v917
      %v964 = vunpack.c.l.b16 %v918
      %v965 = vpack.c.b16 %v944, %v943
      %v966 = vpack.c.b16 %v946, %v945
      %v967 = vpack.c.b16 %v948, %v947
      %v968 = vpack.c.b16 %v950, %v949
      %v969 = vpack.c.b16 %v952, %v951
      %v970 = vpack.c.b16 %v954, %v953
      %v971 = vpack.c.b16 %v956, %v955
      %v972 = vpack.c.b16 %v958, %v957
      %v973 = vpack.c.b16 %v960, %v959
      %v974 = vpack.c.b16 %v962, %v961
      %v975 = vpack.c.b16 %v964, %v963
      %vm976 = vcmask 1044480
      %v977 = vrot.slane %v965, 3
      %v978 = vrot.slane %v966, 3
      %v979 = vsel %vm976, %v977, %v978
      %v980 = vrot.slane %v967, 3
      %v981 = vsel %vm976, %v978, %v980
      %v982 = vrot.slane %v968, 3
      %v983 = vsel %vm976, %v980, %v982
      %v984 = vrot.slane %v969, 3
      %v985 = vsel %vm976, %v982, %v984
      %v986 = vrot.slane %v970, 3
      %v987 = vsel %vm976, %v984, %v986
      %v988 = vrot.slane %v971, 3
      %v989 = vsel %vm976, %v986, %v988
      %v990 = vrot.slane %v972, 3
      %v991 = vsel %vm976, %v988, %v990
      %v992 = vrot.slane %v973, 3
      %v993 = vsel %vm976, %v990, %v992
      %v994 = vrot.slane %v974, 3
      %v995 = vsel %vm976, %v992, %v994
      %v996 = vrot.slane %v975, 3
      %v997 = vsel %vm976, %v994, %v996
      %v999 = vsel %vm387, %v979, 0
      %v1002 = vsel %vm387, %v981, 0
      %v1005 = vsel %vm387, %v983, 0
      %v1008 = vsel %vm387, %v985, 0
      %v1011 = vsel %vm387, %v987, 0
      %v1014 = vsel %vm387, %v989, 0
      %v1017 = vsel %vm387, %v991, 0
      %v1020 = vsel %vm387, %v993, 0
      %v1023 = vsel %vm387, %v995, 0
      %v1026 = vsel %vm387, %v997, 0
      %v1029 = vsel %vm387, %v996, 0
      %v1032 = vsel %vm421, %v920, 0
      %1034 = vmatprep.subr.bf16.mxu0 0
      %1035 = vmatpush1.bf16.msra.mxu0 %v1032
      %1036 = vmatprep.subr.bf16.mxu0 0
      %1037 = vmatpush1.bf16.msra.mxu0 0
      %1038 = vmatprep.subr.bf16.mxu0 0
      %1039 = vmatpush1.bf16.msra.mxu0 0
      %1040 = vmatprep.subr.bf16.mxu0 0
      %1041 = vmatpush1.bf16.msra.mxu0 0
      %1042 = vmatprep.subr.bf16.mxu0 0
      %1043 = vmatpush1.bf16.msra.mxu0 0
      %1044 = vmatprep.subr.bf16.mxu0 0
      %1045 = vmatpush1.bf16.msra.mxu0 0
      %1046 = vmatprep.subr.bf16.mxu0 0
      %1047 = vmatpush1.bf16.msra.mxu0 0
      %1048 = vmatprep.subr.bf16.mxu0 0
      %1049 = vmatpush1.bf16.msra.mxu0 0
      %1050 = vmatprep.subr.bf16.mxu0 0
      %1051 = vmatpush1.bf16.msra.mxu0 0
      %1052 = vmatprep.subr.bf16.mxu0 0
      %1053 = vmatpush1.bf16.msra.mxu0 0
      %1054 = vmatprep.subr.bf16.mxu0 0
      %1055 = vmatpush1.bf16.msra.mxu0 0
      %1056 = vmatprep.subr.bf16.mxu0 0
      %1057 = vmatpush1.bf16.msra.mxu0 0
      %1058 = vmatprep.subr.bf16.mxu0 0
      %1059 = vmatpush1.bf16.msra.mxu0 0
      %1060 = vmatprep.subr.bf16.mxu0 0
      %1061 = vmatpush1.bf16.msra.mxu0 0
      %1062 = vmatprep.subr.bf16.mxu0 0
      %1063 = vmatpush1.bf16.msra.mxu0 0
      %1064 = vmatprep.subr.bf16.mxu0 0
      %1065 = vmatpush1.bf16.msra.mxu0 0
      %1066 = vmatprep.mubr.bf16.mxu0 0
      %1067 = vmatmul.mubr.bf16.gmra.mrb[0].mxu0 %v999
      %v1068 = vpop.f32.mrb[0].mxu0
      %v1069 = vadd.f32 0.0, %v1068
      %v1070 = vpop.f32.mrb[0].mxu0
      %v1071 = vpop.f32.mrb[0].mxu0
      %v1072 = vadd.f32 0.0, %v1071
      %v1073 = vpop.f32.mrb[0].mxu0
      %1074 = vmatprep.mubr.bf16.mxu0 0
      %1075 = vmatmul.mubr.bf16.gmra.mrb[0].mxu0 %v1002
      %v1076 = vpop.f32.mrb[0].mxu0
      %v1077 = vadd.f32 0.0, %v1076
      %v1078 = vpop.f32.mrb[0].mxu0
      %v1079 = vpop.f32.mrb[0].mxu0
      %v1080 = vadd.f32 0.0, %v1079
      %v1081 = vpop.f32.mrb[0].mxu0
      %1082 = vmatprep.mubr.bf16.mxu0 0
      %1083 = vmatmul.mubr.bf16.gmra.mrb[0].mxu0 %v1005
      %v1084 = vpop.f32.mrb[0].mxu0
      %v1085 = vadd.f32 0.0, %v1084
      %v1086 = vpop.f32.mrb[0].mxu0
      %v1087 = vpop.f32.mrb[0].mxu0
      %v1088 = vadd.f32 0.0, %v1087
      %v1089 = vpop.f32.mrb[0].mxu0
      %1090 = vmatprep.mubr.bf16.mxu0 0
      %1091 = vmatmul.mubr.bf16.gmra.mrb[0].mxu0 %v1008
      %v1092 = vpop.f32.mrb[0].mxu0
      %v1093 = vadd.f32 0.0, %v1092
      %v1094 = vpop.f32.mrb[0].mxu0
      %v1095 = vpop.f32.mrb[0].mxu0
      %v1096 = vadd.f32 0.0, %v1095
      %v1097 = vpop.f32.mrb[0].mxu0
      %1098 = vmatprep.mubr.bf16.mxu0 0
      %1099 = vmatmul.mubr.bf16.gmra.mrb[0].mxu0 %v1011
      %v1100 = vpop.f32.mrb[0].mxu0
      %v1101 = vadd.f32 0.0, %v1100
      %v1102 = vpop.f32.mrb[0].mxu0
      %v1103 = vpop.f32.mrb[0].mxu0
      %v1104 = vadd.f32 0.0, %v1103
      %v1105 = vpop.f32.mrb[0].mxu0
      %1106 = vmatprep.mubr.bf16.mxu0 0
      %1107 = vmatmul.mubr.bf16.gmra.mrb[0].mxu0 %v1014
      %v1108 = vpop.f32.mrb[0].mxu0
      %v1109 = vadd.f32 0.0, %v1108
      %v1110 = vpop.f32.mrb[0].mxu0
      %v1111 = vpop.f32.mrb[0].mxu0
      %v1112 = vadd.f32 0.0, %v1111
      %v1113 = vpop.f32.mrb[0].mxu0
      %1114 = vmatprep.mubr.bf16.mxu0 0
      %1115 = vmatmul.mubr.bf16.gmra.mrb[0].mxu0 %v1017
      %v1116 = vpop.f32.mrb[0].mxu0
      %v1117 = vadd.f32 0.0, %v1116
      %v1118 = vpop.f32.mrb[0].mxu0
      %v1119 = vpop.f32.mrb[0].mxu0
      %v1120 = vadd.f32 0.0, %v1119
      %v1121 = vpop.f32.mrb[0].mxu0
      %1122 = vmatprep.mubr.bf16.mxu0 0
      %1123 = vmatmul.mubr.bf16.gmra.mrb[0].mxu0 %v1020
      %v1124 = vpop.f32.mrb[0].mxu0
      %v1125 = vadd.f32 0.0, %v1124
      %v1126 = vpop.f32.mrb[0].mxu0
      %v1127 = vpop.f32.mrb[0].mxu0
      %v1128 = vadd.f32 0.0, %v1127
      %v1129 = vpop.f32.mrb[0].mxu0
      %1130 = vmatprep.mubr.bf16.mxu0 0
      %1131 = vmatmul.mubr.bf16.gmra.mrb[0].mxu0 %v1023
      %v1132 = vpop.f32.mrb[0].mxu0
      %v1133 = vadd.f32 0.0, %v1132
      %v1134 = vpop.f32.mrb[0].mxu0
      %v1135 = vpop.f32.mrb[0].mxu0
      %v1136 = vadd.f32 0.0, %v1135
      %v1137 = vpop.f32.mrb[0].mxu0
      %1138 = vmatprep.mubr.bf16.mxu0 0
      %1139 = vmatmul.mubr.bf16.gmra.mrb[0].mxu0 %v1026
      %v1140 = vpop.f32.mrb[0].mxu0
      %v1141 = vadd.f32 0.0, %v1140
      %v1142 = vpop.f32.mrb[0].mxu0
      %v1143 = vpop.f32.mrb[0].mxu0
      %v1144 = vadd.f32 0.0, %v1143
      %v1145 = vpop.f32.mrb[0].mxu0
      %1146 = vmatprep.mubr.bf16.mxu0 0
      %1147 = vmatmul.mubr.bf16.gmra.mrb[0].mxu0 %v1029
      %v1148 = vpop.f32.mrb[0].mxu0
      %v1149 = vadd.f32 0.0, %v1148
      %v1150 = vpop.f32.mrb[0].mxu0
      %v1151 = vpop.f32.mrb[0].mxu0
      %v1152 = vpop.f32.mrb[0].mxu0
      %1153 = vdwg.mxu0
      %v1154 = vadd.f32 %v876, %v1069
      %v1155 = vadd.f32 %v877, %v1072
      %v1156 = vadd.f32 %v878, %v1077
      %v1157 = vadd.f32 %v879, %v1080
      %v1158 = vadd.f32 %v880, %v1085
      %v1159 = vadd.f32 %v881, %v1088
      %v1160 = vadd.f32 %v882, %v1093
      %v1161 = vadd.f32 %v883, %v1096
      %v1162 = vadd.f32 %v884, %v1101
      %v1163 = vadd.f32 %v885, %v1104
      %v1164 = vadd.f32 %v886, %v1109
      %v1165 = vadd.f32 %v887, %v1112
      %v1166 = vadd.f32 %v888, %v1117
      %v1167 = vadd.f32 %v889, %v1120
      %v1168 = vadd.f32 %v890, %v1125
      %v1169 = vadd.f32 %v891, %v1128
      %v1170 = vadd.f32 %v892, %v1133
      %v1171 = vadd.f32 %v893, %v1136
      %v1172 = vadd.f32 %v894, %v1141
      %v1173 = vadd.f32 %v895, %v1144
      %v1174 = vadd.f32 %v896, %v1149
      %v1175 = vld [vmem:[%s207 + $0x58] sm:$0xf]
      %s1176 = scalar_lea.vmem %s1, 16
      %v1177 = vld [vmem:[%s1176] sm:$0xf]
      %v1179 = vunpack.c.l.b16 %v1175
      %v1180 = vpack.c.b16 %v1179, %v963
      %vm1181 = vsmask.f32 4352
      %v1183 = vshrl.u32 %v965, 16
      %v1185 = vrot.slane %v1183, 3
      %v1186 = vshll.u32 %v965, 16
      %v1188 = vrot.slane %v1186, 4
      %v1189 = vor.u32 %v1185, %v1188
      %v1191 = vshrl.u32 %v966, 16
      %v1193 = vrot.slane %v1191, 3
      %v1194 = vshll.u32 %v966, 16
      %v1196 = vrot.slane %v1194, 4
      %v1197 = vor.u32 %v1193, %v1196
      %v1198 = vsel %vm1181, %v1189, %v1197
      %v1200 = vshrl.u32 %v967, 16
      %v1202 = vrot.slane %v1200, 3
      %v1203 = vshll.u32 %v967, 16
      %v1205 = vrot.slane %v1203, 4
      %v1206 = vor.u32 %v1202, %v1205
      %v1207 = vsel %vm1181, %v1197, %v1206
      %v1209 = vshrl.u32 %v968, 16
      %v1211 = vrot.slane %v1209, 3
      %v1212 = vshll.u32 %v968, 16
      %v1214 = vrot.slane %v1212, 4
      %v1215 = vor.u32 %v1211, %v1214
      %v1216 = vsel %vm1181, %v1206, %v1215
      %v1218 = vshrl.u32 %v969, 16
      %v1220 = vrot.slane %v1218, 3
      %v1221 = vshll.u32 %v969, 16
      %v1223 = vrot.slane %v1221, 4
      %v1224 = vor.u32 %v1220, %v1223
      %v1225 = vsel %vm1181, %v1215, %v1224
      %v1227 = vshrl.u32 %v970, 16
      %v1229 = vrot.slane %v1227, 3
      %v1230 = vshll.u32 %v970, 16
      %v1232 = vrot.slane %v1230, 4
      %v1233 = vor.u32 %v1229, %v1232
      %v1234 = vsel %vm1181, %v1224, %v1233
      %v1236 = vshrl.u32 %v971, 16
      %v1238 = vrot.slane %v1236, 3
      %v1239 = vshll.u32 %v971, 16
      %v1241 = vrot.slane %v1239, 4
      %v1242 = vor.u32 %v1238, %v1241
      %v1243 = vsel %vm1181, %v1233, %v1242
      %v1245 = vshrl.u32 %v972, 16
      %v1247 = vrot.slane %v1245, 3
      %v1248 = vshll.u32 %v972, 16
      %v1250 = vrot.slane %v1248, 4
      %v1251 = vor.u32 %v1247, %v1250
      %v1252 = vsel %vm1181, %v1242, %v1251
      %v1254 = vshrl.u32 %v973, 16
      %v1256 = vrot.slane %v1254, 3
      %v1257 = vshll.u32 %v973, 16
      %v1259 = vrot.slane %v1257, 4
      %v1260 = vor.u32 %v1256, %v1259
      %v1261 = vsel %vm1181, %v1251, %v1260
      %v1263 = vshrl.u32 %v974, 16
      %v1265 = vrot.slane %v1263, 3
      %v1266 = vshll.u32 %v974, 16
      %v1268 = vrot.slane %v1266, 4
      %v1269 = vor.u32 %v1265, %v1268
      %v1270 = vsel %vm1181, %v1260, %v1269
      %v1272 = vshrl.u32 %v1180, 16
      %v1274 = vrot.slane %v1272, 3
      %v1275 = vshll.u32 %v1180, 16
      %v1277 = vrot.slane %v1275, 4
      %v1278 = vor.u32 %v1274, %v1277
      %v1279 = vsel %vm1181, %v1269, %v1278
      %v1281 = vsel %vm387, %v1198, 0
      %v1284 = vsel %vm387, %v1207, 0
      %v1287 = vsel %vm387, %v1216, 0
      %v1290 = vsel %vm387, %v1225, 0
      %v1293 = vsel %vm387, %v1234, 0
      %v1296 = vsel %vm387, %v1243, 0
      %v1299 = vsel %vm387, %v1252, 0
      %v1302 = vsel %vm387, %v1261, 0
      %v1305 = vsel %vm387, %v1270, 0
      %v1308 = vsel %vm387, %v1279, 0
      %v1311 = vsel %vm387, %v1278, 0
      %v1314 = vsel %vm421, %v1177, 0
      %1316 = vmatprep.subr.bf16.mxu0 0
      %1317 = vmatpush1.bf16.msra.mxu0 %v1314
      %1318 = vmatprep.subr.bf16.mxu0 0
      %1319 = vmatpush1.bf16.msra.mxu0 0
      %1320 = vmatprep.subr.bf16.mxu0 0
      %1321 = vmatpush1.bf16.msra.mxu0 0
      %1322 = vmatprep.subr.bf16.mxu0 0
      %1323 = vmatpush1.bf16.msra.mxu0 0
      %1324 = vmatprep.subr.bf16.mxu0 0
      %1325 = vmatpush1.bf16.msra.mxu0 0
      %1326 = vmatprep.subr.bf16.mxu0 0
      %1327 = vmatpush1.bf16.msra.mxu0 0
      %1328 = vmatprep.subr.bf16.mxu0 0
      %1329 = vmatpush1.bf16.msra.mxu0 0
      %1330 = vmatprep.subr.bf16.mxu0 0
      %1331 = vmatpush1.bf16.msra.mxu0 0
      %1332 = vmatprep.subr.bf16.mxu0 0
      %1333 = vmatpush1.bf16.msra.mxu0 0
      %1334 = vmatprep.subr.bf16.mxu0 0
      %1335 = vmatpush1.bf16.msra.mxu0 0
      %1336 = vmatprep.subr.bf16.mxu0 0
      %1337 = vmatpush1.bf16.msra.mxu0 0
      %1338 = vmatprep.subr.bf16.mxu0 0
      %1339 = vmatpush1.bf16.msra.mxu0 0
      %1340 = vmatprep.subr.bf16.mxu0 0
      %1341 = vmatpush1.bf16.msra.mxu0 0
      %1342 = vmatprep.subr.bf16.mxu0 0
      %1343 = vmatpush1.bf16.msra.mxu0 0
      %1344 = vmatprep.subr.bf16.mxu0 0
      %1345 = vmatpush1.bf16.msra.mxu0 0
      %1346 = vmatprep.subr.bf16.mxu0 0
      %1347 = vmatpush1.bf16.msra.mxu0 0
      %1348 = vmatprep.mubr.bf16.mxu0 0
      %1349 = vmatmul.mubr.bf16.gmra.mrb[0].mxu0 %v1281
      %v1350 = vpop.f32.mrb[0].mxu0
      %v1351 = vadd.f32 0.0, %v1350
      %v1352 = vpop.f32.mrb[0].mxu0
      %v1353 = vpop.f32.mrb[0].mxu0
      %v1354 = vadd.f32 0.0, %v1353
      %v1355 = vpop.f32.mrb[0].mxu0
      %1356 = vmatprep.mubr.bf16.mxu0 0
      %1357 = vmatmul.mubr.bf16.gmra.mrb[0].mxu0 %v1284
      %v1358 = vpop.f32.mrb[0].mxu0
      %v1359 = vadd.f32 0.0, %v1358
      %v1360 = vpop.f32.mrb[0].mxu0
      %v1361 = vpop.f32.mrb[0].mxu0
      %v1362 = vadd.f32 0.0, %v1361
      %v1363 = vpop.f32.mrb[0].mxu0
      %1364 = vmatprep.mubr.bf16.mxu0 0
      %1365 = vmatmul.mubr.bf16.gmra.mrb[0].mxu0 %v1287
      %v1366 = vpop.f32.mrb[0].mxu0
      %v1367 = vadd.f32 0.0, %v1366
      %v1368 = vpop.f32.mrb[0].mxu0
      %v1369 = vpop.f32.mrb[0].mxu0
      %v1370 = vadd.f32 0.0, %v1369
      %v1371 = vpop.f32.mrb[0].mxu0
      %1372 = vmatprep.mubr.bf16.mxu0 0
      %1373 = vmatmul.mubr.bf16.gmra.mrb[0].mxu0 %v1290
      %v1374 = vpop.f32.mrb[0].mxu0
      %v1375 = vadd.f32 0.0, %v1374
      %v1376 = vpop.f32.mrb[0].mxu0
      %v1377 = vpop.f32.mrb[0].mxu0
      %v1378 = vadd.f32 0.0, %v1377
      %v1379 = vpop.f32.mrb[0].mxu0
      %1380 = vmatprep.mubr.bf16.mxu0 0
      %1381 = vmatmul.mubr.bf16.gmra.mrb[0].mxu0 %v1293
      %v1382 = vpop.f32.mrb[0].mxu0
      %v1383 = vadd.f32 0.0, %v1382
      %v1384 = vpop.f32.mrb[0].mxu0
      %v1385 = vpop.f32.mrb[0].mxu0
      %v1386 = vadd.f32 0.0, %v1385
      %v1387 = vpop.f32.mrb[0].mxu0
      %1388 = vmatprep.mubr.bf16.mxu0 0
      %1389 = vmatmul.mubr.bf16.gmra.mrb[0].mxu0 %v1296
      %v1390 = vpop.f32.mrb[0].mxu0
      %v1391 = vadd.f32 0.0, %v1390
      %v1392 = vpop.f32.mrb[0].mxu0
      %v1393 = vpop.f32.mrb[0].mxu0
      %v1394 = vadd.f32 0.0, %v1393
      %v1395 = vpop.f32.mrb[0].mxu0
      %1396 = vmatprep.mubr.bf16.mxu0 0
      %1397 = vmatmul.mubr.bf16.gmra.mrb[0].mxu0 %v1299
      %v1398 = vpop.f32.mrb[0].mxu0
      %v1399 = vadd.f32 0.0, %v1398
      %v1400 = vpop.f32.mrb[0].mxu0
      %v1401 = vpop.f32.mrb[0].mxu0
      %v1402 = vadd.f32 0.0, %v1401
      %v1403 = vpop.f32.mrb[0].mxu0
      %1404 = vmatprep.mubr.bf16.mxu0 0
      %1405 = vmatmul.mubr.bf16.gmra.mrb[0].mxu0 %v1302
      %v1406 = vpop.f32.mrb[0].mxu0
      %v1407 = vadd.f32 0.0, %v1406
      %v1408 = vpop.f32.mrb[0].mxu0
      %v1409 = vpop.f32.mrb[0].mxu0
      %v1410 = vadd.f32 0.0, %v1409
      %v1411 = vpop.f32.mrb[0].mxu0
      %1412 = vmatprep.mubr.bf16.mxu0 0
      %1413 = vmatmul.mubr.bf16.gmra.mrb[0].mxu0 %v1305
      %v1414 = vpop.f32.mrb[0].mxu0
      %v1415 = vadd.f32 0.0, %v1414
      %v1416 = vpop.f32.mrb[0].mxu0
      %v1417 = vpop.f32.mrb[0].mxu0
      %v1418 = vadd.f32 0.0, %v1417
      %v1419 = vpop.f32.mrb[0].mxu0
      %1420 = vmatprep.mubr.bf16.mxu0 0
      %1421 = vmatmul.mubr.bf16.gmra.mrb[0].mxu0 %v1308
      %v1422 = vpop.f32.mrb[0].mxu0
      %v1423 = vadd.f32 0.0, %v1422
      %v1424 = vpop.f32.mrb[0].mxu0
      %v1425 = vpop.f32.mrb[0].mxu0
      %v1426 = vadd.f32 0.0, %v1425
      %v1427 = vpop.f32.mrb[0].mxu0
      %1428 = vmatprep.mubr.bf16.mxu0 0
      %1429 = vmatmul.mubr.bf16.gmra.mrb[0].mxu0 %v1311
      %v1430 = vpop.f32.mrb[0].mxu0
      %v1431 = vadd.f32 0.0, %v1430
      %v1432 = vpop.f32.mrb[0].mxu0
      %v1433 = vpop.f32.mrb[0].mxu0
      %v1434 = vpop.f32.mrb[0].mxu0
      %1435 = vdwg.mxu0
      %v1436 = vadd.f32 %v1154, %v1351
      %v1437 = vadd.f32 %v1155, %v1354
      %v1438 = vadd.f32 %v1156, %v1359
      %v1439 = vadd.f32 %v1157, %v1362
      %v1440 = vadd.f32 %v1158, %v1367
      %v1441 = vadd.f32 %v1159, %v1370
      %v1442 = vadd.f32 %v1160, %v1375
      %v1443 = vadd.f32 %v1161, %v1378
      %v1444 = vadd.f32 %v1162, %v1383
      %v1445 = vadd.f32 %v1163, %v1386
      %v1446 = vadd.f32 %v1164, %v1391
      %v1447 = vadd.f32 %v1165, %v1394
      %v1448 = vadd.f32 %v1166, %v1399
      %v1449 = vadd.f32 %v1167, %v1402
      %v1450 = vadd.f32 %v1168, %v1407
      %v1451 = vadd.f32 %v1169, %v1410
      %v1452 = vadd.f32 %v1170, %v1415
      %v1453 = vadd.f32 %v1171, %v1418
      %v1454 = vadd.f32 %v1172, %v1423
      %v1455 = vadd.f32 %v1173, %v1426
      %v1456 = vadd.f32 %v1174, %v1431
      %s1457 = scalar_lea.vmem %s1, 20
      %v1458 = vld [vmem:[%s1457] sm:$0xf]
      %v1459 = vpack.c.b16 %v945, %v944
      %v1460 = vpack.c.b16 %v947, %v946
      %v1461 = vpack.c.b16 %v949, %v948
      %v1462 = vpack.c.b16 %v951, %v950
      %v1463 = vpack.c.b16 %v953, %v952
      %v1464 = vpack.c.b16 %v955, %v954
      %v1465 = vpack.c.b16 %v957, %v956
      %v1466 = vpack.c.b16 %v959, %v958
      %v1467 = vpack.c.b16 %v961, %v960
      %v1468 = vpack.c.b16 %v963, %v962
      %v1469 = vpack.c.b16 %v1179, %v1179
      %v1471 = vsel %vm387, %v1459, 0
      %v1474 = vsel %vm387, %v1460, 0
      %v1477 = vsel %vm387, %v1461, 0
      %v1480 = vsel %vm387, %v1462, 0
      %v1483 = vsel %vm387, %v1463, 0
      %v1486 = vsel %vm387, %v1464, 0
      %v1489 = vsel %vm387, %v1465, 0
      %v1492 = vsel %vm387, %v1466, 0
      %v1495 = vsel %vm387, %v1467, 0
      %v1498 = vsel %vm387, %v1468, 0
      %v1501 = vsel %vm387, %v1469, 0
      %v1504 = vsel %vm421, %v1458, 0
      %1506 = vmatprep.subr.bf16.mxu0 0
      %1507 = vmatpush1.bf16.msra.mxu0 %v1504
      %1508 = vmatprep.subr.bf16.mxu0 0
      %1509 = vmatpush1.bf16.msra.mxu0 0
      %1510 = vmatprep.subr.bf16.mxu0 0
      %1511 = vmatpush1.bf16.msra.mxu0 0
      %1512 = vmatprep.subr.bf16.mxu0 0
      %1513 = vmatpush1.bf16.msra.mxu0 0
      %1514 = vmatprep.subr.bf16.mxu0 0
      %1515 = vmatpush1.bf16.msra.mxu0 0
      %1516 = vmatprep.subr.bf16.mxu0 0
      %1517 = vmatpush1.bf16.msra.mxu0 0
      %1518 = vmatprep.subr.bf16.mxu0 0
      %1519 = vmatpush1.bf16.msra.mxu0 0
      %1520 = vmatprep.subr.bf16.mxu0 0
      %1521 = vmatpush1.bf16.msra.mxu0 0
      %1522 = vmatprep.subr.bf16.mxu0 0
      %1523 = vmatpush1.bf16.msra.mxu0 0
      %1524 = vmatprep.subr.bf16.mxu0 0
      %1525 = vmatpush1.bf16.msra.mxu0 0
      %1526 = vmatprep.subr.bf16.mxu0 0
      %1527 = vmatpush1.bf16.msra.mxu0 0
      %1528 = vmatprep.subr.bf16.mxu0 0
      %1529 = vmatpush1.bf16.msra.mxu0 0
      %1530 = vmatprep.subr.bf16.mxu0 0
      %1531 = vmatpush1.bf16.msra.mxu0 0
      %1532 = vmatprep.subr.bf16.mxu0 0
      %1533 = vmatpush1.bf16.msra.mxu0 0
      %1534 = vmatprep.subr.bf16.mxu0 0
      %1535 = vmatpush1.bf16.msra.mxu0 0
      %1536 = vmatprep.subr.bf16.mxu0 0
      %1537 = vmatpush1.bf16.msra.mxu0 0
      %1538 = vmatprep.mubr.bf16.mxu0 0
      %1539 = vmatmul.mubr.bf16.gmra.mrb[0].mxu0 %v1471
      %v1540 = vpop.f32.mrb[0].mxu0
      %v1541 = vadd.f32 0.0, %v1540
      %v1542 = vpop.f32.mrb[0].mxu0
      %v1543 = vpop.f32.mrb[0].mxu0
      %v1544 = vadd.f32 0.0, %v1543
      %v1545 = vpop.f32.mrb[0].mxu0
      %1546 = vmatprep.mubr.bf16.mxu0 0
      %1547 = vmatmul.mubr.bf16.gmra.mrb[0].mxu0 %v1474
      %v1548 = vpop.f32.mrb[0].mxu0
      %v1549 = vadd.f32 0.0, %v1548
      %v1550 = vpop.f32.mrb[0].mxu0
      %v1551 = vpop.f32.mrb[0].mxu0
      %v1552 = vadd.f32 0.0, %v1551
      %v1553 = vpop.f32.mrb[0].mxu0
      %1554 = vmatprep.mubr.bf16.mxu0 0
      %1555 = vmatmul.mubr.bf16.gmra.mrb[0].mxu0 %v1477
      %v1556 = vpop.f32.mrb[0].mxu0
      %v1557 = vadd.f32 0.0, %v1556
      %v1558 = vpop.f32.mrb[0].mxu0
      %v1559 = vpop.f32.mrb[0].mxu0
      %v1560 = vadd.f32 0.0, %v1559
      %v1561 = vpop.f32.mrb[0].mxu0
      %1562 = vmatprep.mubr.bf16.mxu0 0
      %1563 = vmatmul.mubr.bf16.gmra.mrb[0].mxu0 %v1480
      %v1564 = vpop.f32.mrb[0].mxu0
      %v1565 = vadd.f32 0.0, %v1564
      %v1566 = vpop.f32.mrb[0].mxu0
      %v1567 = vpop.f32.mrb[0].mxu0
      %v1568 = vadd.f32 0.0, %v1567
      %v1569 = vpop.f32.mrb[0].mxu0
      %1570 = vmatprep.mubr.bf16.mxu0 0
      %1571 = vmatmul.mubr.bf16.gmra.mrb[0].mxu0 %v1483
      %v1572 = vpop.f32.mrb[0].mxu0
      %v1573 = vadd.f32 0.0, %v1572
      %v1574 = vpop.f32.mrb[0].mxu0
      %v1575 = vpop.f32.mrb[0].mxu0
      %v1576 = vadd.f32 0.0, %v1575
      %v1577 = vpop.f32.mrb[0].mxu0
      %1578 = vmatprep.mubr.bf16.mxu0 0
      %1579 = vmatmul.mubr.bf16.gmra.mrb[0].mxu0 %v1486
      %v1580 = vpop.f32.mrb[0].mxu0
      %v1581 = vadd.f32 0.0, %v1580
      %v1582 = vpop.f32.mrb[0].mxu0
      %v1583 = vpop.f32.mrb[0].mxu0
      %v1584 = vadd.f32 0.0, %v1583
      %v1585 = vpop.f32.mrb[0].mxu0
      %1586 = vmatprep.mubr.bf16.mxu0 0
      %1587 = vmatmul.mubr.bf16.gmra.mrb[0].mxu0 %v1489
      %v1588 = vpop.f32.mrb[0].mxu0
      %v1589 = vadd.f32 0.0, %v1588
      %v1590 = vpop.f32.mrb[0].mxu0
      %v1591 = vpop.f32.mrb[0].mxu0
      %v1592 = vadd.f32 0.0, %v1591
      %v1593 = vpop.f32.mrb[0].mxu0
      %1594 = vmatprep.mubr.bf16.mxu0 0
      %1595 = vmatmul.mubr.bf16.gmra.mrb[0].mxu0 %v1492
      %v1596 = vpop.f32.mrb[0].mxu0
      %v1597 = vadd.f32 0.0, %v1596
      %v1598 = vpop.f32.mrb[0].mxu0
      %v1599 = vpop.f32.mrb[0].mxu0
      %v1600 = vadd.f32 0.0, %v1599
      %v1601 = vpop.f32.mrb[0].mxu0
      %1602 = vmatprep.mubr.bf16.mxu0 0
      %1603 = vmatmul.mubr.bf16.gmra.mrb[0].mxu0 %v1495
      %v1604 = vpop.f32.mrb[0].mxu0
      %v1605 = vadd.f32 0.0, %v1604
      %v1606 = vpop.f32.mrb[0].mxu0
      %v1607 = vpop.f32.mrb[0].mxu0
      %v1608 = vadd.f32 0.0, %v1607
      %v1609 = vpop.f32.mrb[0].mxu0
      %1610 = vmatprep.mubr.bf16.mxu0 0
      %1611 = vmatmul.mubr.bf16.gmra.mrb[0].mxu0 %v1498
      %v1612 = vpop.f32.mrb[0].mxu0
      %v1613 = vadd.f32 0.0, %v1612
      %v1614 = vpop.f32.mrb[0].mxu0
      %v1615 = vpop.f32.mrb[0].mxu0
      %v1616 = vadd.f32 0.0, %v1615
      %v1617 = vpop.f32.mrb[0].mxu0
      %1618 = vmatprep.mubr.bf16.mxu0 0
      %1619 = vmatmul.mubr.bf16.gmra.mrb[0].mxu0 %v1501
      %v1620 = vpop.f32.mrb[0].mxu0
      %v1621 = vadd.f32 0.0, %v1620
      %v1622 = vpop.f32.mrb[0].mxu0
      %v1623 = vpop.f32.mrb[0].mxu0
      %v1624 = vpop.f32.mrb[0].mxu0
      %1625 = vdwg.mxu0
      %v1626 = vadd.f32 %v1436, %v1541
      %v1627 = vadd.f32 %v1437, %v1544
      %v1628 = vadd.f32 %v1438, %v1549
      %v1629 = vadd.f32 %v1439, %v1552
      %v1630 = vadd.f32 %v1440, %v1557
      %v1631 = vadd.f32 %v1441, %v1560
      %v1632 = vadd.f32 %v1442, %v1565
      %v1633 = vadd.f32 %v1443, %v1568
      %v1634 = vadd.f32 %v1444, %v1573
      %v1635 = vadd.f32 %v1445, %v1576
      %v1636 = vadd.f32 %v1446, %v1581
      %v1637 = vadd.f32 %v1447, %v1584
      %v1638 = vadd.f32 %v1448, %v1589
      %v1639 = vadd.f32 %v1449, %v1592
      %v1640 = vadd.f32 %v1450, %v1597
      %v1641 = vadd.f32 %v1451, %v1600
      %v1642 = vadd.f32 %v1452, %v1605
      %v1643 = vadd.f32 %v1453, %v1608
      %v1644 = vadd.f32 %v1454, %v1613
      %v1645 = vadd.f32 %v1455, %v1616
      %v1646 = vadd.f32 %v1456, %v1621
      %v1647 = vld [vmem:[%s207 + $0xc] sm:$0xc]
      %v1648 = vld [vmem:[%s207 + $0x10] sm:$0xf]
      %v1649 = vld [vmem:[%s207 + $0x14] sm:$0xf]
      %v1650 = vld [vmem:[%s207 + $0x18] sm:$0xf]
      %v1651 = vld [vmem:[%s207 + $0x1c] sm:$0xf]
      %v1652 = vld [vmem:[%s207 + $0x20] sm:$0xf]
      %v1653 = vld [vmem:[%s207 + $0x24] sm:$0xf]
      %v1654 = vld [vmem:[%s207 + $0x28] sm:$0xf]
      %v1655 = vld [vmem:[%s207 + $0x2c] sm:$0xf]
      %v1656 = vld [vmem:[%s207 + $0x30] sm:$0xf]
      %v1657 = vld [vmem:[%s207 + $0x34] sm:$0xf]
      %v1658 = vld [vmem:[%s207 + $0x38] sm:$0xf]
      %v1659 = vld [vmem:[%s207 + $0x3c] sm:$0xf]
      %v1660 = vld [vmem:[%s207 + $0x40] sm:$0xf]
      %v1661 = vld [vmem:[%s207 + $0x44] sm:$0xf]
      %v1662 = vld [vmem:[%s207 + $0x48] sm:$0xf]
      %v1663 = vld [vmem:[%s207 + $0x4c] sm:$0xf]
      %v1664 = vld [vmem:[%s207 + $0x50] sm:$0xf]
      %v1665 = vld [vmem:[%s207 + $0x54] sm:$0xf]
      %v1666 = vld [vmem:[%s207 + $0x58] sm:$0xf]
      %v1667 = vld [vmem:[%s207 + $0x5c] sm:$0xf]
      %v1668 = vld [vmem:[%s207 + $0x60] sm:$0x3]
      %s1669 = scalar_lea.vmem %s1, 24
      %v1670 = vld [vmem:[%s1669] sm:$0xf]
      %v1693 = vunpack.c.l.b16 %v1647
      %v1694 = vunpack.c.l.b16 %v1648
      %v1695 = vunpack.c.l.b16 %v1649
      %v1696 = vunpack.c.l.b16 %v1650
      %v1697 = vunpack.c.l.b16 %v1651
      %v1698 = vunpack.c.l.b16 %v1652
      %v1699 = vunpack.c.l.b16 %v1653
      %v1700 = vunpack.c.l.b16 %v1654
      %v1701 = vunpack.c.l.b16 %v1655
      %v1702 = vunpack.c.l.b16 %v1656
      %v1703 = vunpack.c.l.b16 %v1657
      %v1704 = vunpack.c.l.b16 %v1658
      %v1705 = vunpack.c.l.b16 %v1659
      %v1706 = vunpack.c.l.b16 %v1660
      %v1707 = vunpack.c.l.b16 %v1661
      %v1708 = vunpack.c.l.b16 %v1662
      %v1709 = vunpack.c.l.b16 %v1663
      %v1710 = vunpack.c.l.b16 %v1664
      %v1711 = vunpack.c.l.b16 %v1665
      %v1712 = vunpack.c.l.b16 %v1666
      %v1713 = vunpack.c.l.b16 %v1667
      %v1714 = vunpack.c.l.b16 %v1668
      %v1715 = vpack.c.b16 %v1694, %v1693
      %v1716 = vpack.c.b16 %v1696, %v1695
      %v1717 = vpack.c.b16 %v1698, %v1697
      %v1718 = vpack.c.b16 %v1700, %v1699
      %v1719 = vpack.c.b16 %v1702, %v1701
      %v1720 = vpack.c.b16 %v1704, %v1703
      %v1721 = vpack.c.b16 %v1706, %v1705
      %v1722 = vpack.c.b16 %v1708, %v1707
      %v1723 = vpack.c.b16 %v1710, %v1709
      %v1724 = vpack.c.b16 %v1712, %v1711
      %v1725 = vpack.c.b16 %v1714, %v1713
      %vm1726 = vcmask 1045504
      %v1727 = vrot.slane %v1715, 2
      %v1728 = vrot.slane %v1716, 2
      %v1729 = vsel %vm1726, %v1727, %v1728
      %v1730 = vrot.slane %v1717, 2
      %v1731 = vsel %vm1726, %v1728, %v1730
      %v1732 = vrot.slane %v1718, 2
      %v1733 = vsel %vm1726, %v1730, %v1732
      %v1734 = vrot.slane %v1719, 2
      %v1735 = vsel %vm1726, %v1732, %v1734
      %v1736 = vrot.slane %v1720, 2
      %v1737 = vsel %vm1726, %v1734, %v1736
      %v1738 = vrot.slane %v1721, 2
      %v1739 = vsel %vm1726, %v1736, %v1738
      %v1740 = vrot.slane %v1722, 2
      %v1741 = vsel %vm1726, %v1738, %v1740
      %v1742 = vrot.slane %v1723, 2
      %v1743 = vsel %vm1726, %v1740, %v1742
      %v1744 = vrot.slane %v1724, 2
      %v1745 = vsel %vm1726, %v1742, %v1744
      %v1746 = vrot.slane %v1725, 2
      %v1747 = vsel %vm1726, %v1744, %v1746
      %v1749 = vsel %vm387, %v1729, 0
      %v1752 = vsel %vm387, %v1731, 0
      %v1755 = vsel %vm387, %v1733, 0
      %v1758 = vsel %vm387, %v1735, 0
      %v1761 = vsel %vm387, %v1737, 0
      %v1764 = vsel %vm387, %v1739, 0
      %v1767 = vsel %vm387, %v1741, 0
      %v1770 = vsel %vm387, %v1743, 0
      %v1773 = vsel %vm387, %v1745, 0
      %v1776 = vsel %vm387, %v1747, 0
      %v1779 = vsel %vm387, %v1746, 0
      %v1782 = vsel %vm421, %v1670, 0
      %1784 = vmatprep.subr.bf16.mxu0 0
      %1785 = vmatpush1.bf16.msra.mxu0 %v1782
      %1786 = vmatprep.subr.bf16.mxu0 0
      %1787 = vmatpush1.bf16.msra.mxu0 0
      %1788 = vmatprep.subr.bf16.mxu0 0
      %1789 = vmatpush1.bf16.msra.mxu0 0
      %1790 = vmatprep.subr.bf16.mxu0 0
      %1791 = vmatpush1.bf16.msra.mxu0 0
      %1792 = vmatprep.subr.bf16.mxu0 0
      %1793 = vmatpush1.bf16.msra.mxu0 0
      %1794 = vmatprep.subr.bf16.mxu0 0
      %1795 = vmatpush1.bf16.msra.mxu0 0
      %1796 = vmatprep.subr.bf16.mxu0 0
      %1797 = vmatpush1.bf16.msra.mxu0 0
      %1798 = vmatprep.subr.bf16.mxu0 0
      %1799 = vmatpush1.bf16.msra.mxu0 0
      %1800 = vmatprep.subr.bf16.mxu0 0
      %1801 = vmatpush1.bf16.msra.mxu0 0
      %1802 = vmatprep.subr.bf16.mxu0 0
      %1803 = vmatpush1.bf16.msra.mxu0 0
      %1804 = vmatprep.subr.bf16.mxu0 0
      %1805 = vmatpush1.bf16.msra.mxu0 0
      %1806 = vmatprep.subr.bf16.mxu0 0
      %1807 = vmatpush1.bf16.msra.mxu0 0
      %1808 = vmatprep.subr.bf16.mxu0 0
      %1809 = vmatpush1.bf16.msra.mxu0 0
      %1810 = vmatprep.subr.bf16.mxu0 0
      %1811 = vmatpush1.bf16.msra.mxu0 0
      %1812 = vmatprep.subr.bf16.mxu0 0
      %1813 = vmatpush1.bf16.msra.mxu0 0
      %1814 = vmatprep.subr.bf16.mxu0 0
      %1815 = vmatpush1.bf16.msra.mxu0 0
      %1816 = vmatprep.mubr.bf16.mxu0 0
      %1817 = vmatmul.mubr.bf16.gmra.mrb[0].mxu0 %v1749
      %v1818 = vpop.f32.mrb[0].mxu0
      %v1819 = vadd.f32 0.0, %v1818
      %v1820 = vpop.f32.mrb[0].mxu0
      %v1821 = vpop.f32.mrb[0].mxu0
      %v1822 = vadd.f32 0.0, %v1821
      %v1823 = vpop.f32.mrb[0].mxu0
      %1824 = vmatprep.mubr.bf16.mxu0 0
      %1825 = vmatmul.mubr.bf16.gmra.mrb[0].mxu0 %v1752
      %v1826 = vpop.f32.mrb[0].mxu0
      %v1827 = vadd.f32 0.0, %v1826
      %v1828 = vpop.f32.mrb[0].mxu0
      %v1829 = vpop.f32.mrb[0].mxu0
      %v1830 = vadd.f32 0.0, %v1829
      %v1831 = vpop.f32.mrb[0].mxu0
      %1832 = vmatprep.mubr.bf16.mxu0 0
      %1833 = vmatmul.mubr.bf16.gmra.mrb[0].mxu0 %v1755
      %v1834 = vpop.f32.mrb[0].mxu0
      %v1835 = vadd.f32 0.0, %v1834
      %v1836 = vpop.f32.mrb[0].mxu0
      %v1837 = vpop.f32.mrb[0].mxu0
      %v1838 = vadd.f32 0.0, %v1837
      %v1839 = vpop.f32.mrb[0].mxu0
      %1840 = vmatprep.mubr.bf16.mxu0 0
      %1841 = vmatmul.mubr.bf16.gmra.mrb[0].mxu0 %v1758
      %v1842 = vpop.f32.mrb[0].mxu0
      %v1843 = vadd.f32 0.0, %v1842
      %v1844 = vpop.f32.mrb[0].mxu0
      %v1845 = vpop.f32.mrb[0].mxu0
      %v1846 = vadd.f32 0.0, %v1845
      %v1847 = vpop.f32.mrb[0].mxu0
      %1848 = vmatprep.mubr.bf16.mxu0 0
      %1849 = vmatmul.mubr.bf16.gmra.mrb[0].mxu0 %v1761
      %v1850 = vpop.f32.mrb[0].mxu0
      %v1851 = vadd.f32 0.0, %v1850
      %v1852 = vpop.f32.mrb[0].mxu0
      %v1853 = vpop.f32.mrb[0].mxu0
      %v1854 = vadd.f32 0.0, %v1853
      %v1855 = vpop.f32.mrb[0].mxu0
      %1856 = vmatprep.mubr.bf16.mxu0 0
      %1857 = vmatmul.mubr.bf16.gmra.mrb[0].mxu0 %v1764
      %v1858 = vpop.f32.mrb[0].mxu0
      %v1859 = vadd.f32 0.0, %v1858
      %v1860 = vpop.f32.mrb[0].mxu0
      %v1861 = vpop.f32.mrb[0].mxu0
      %v1862 = vadd.f32 0.0, %v1861
      %v1863 = vpop.f32.mrb[0].mxu0
      %1864 = vmatprep.mubr.bf16.mxu0 0
      %1865 = vmatmul.mubr.bf16.gmra.mrb[0].mxu0 %v1767
      %v1866 = vpop.f32.mrb[0].mxu0
      %v1867 = vadd.f32 0.0, %v1866
      %v1868 = vpop.f32.mrb[0].mxu0
      %v1869 = vpop.f32.mrb[0].mxu0
      %v1870 = vadd.f32 0.0, %v1869
      %v1871 = vpop.f32.mrb[0].mxu0
      %1872 = vmatprep.mubr.bf16.mxu0 0
      %1873 = vmatmul.mubr.bf16.gmra.mrb[0].mxu0 %v1770
      %v1874 = vpop.f32.mrb[0].mxu0
      %v1875 = vadd.f32 0.0, %v1874
      %v1876 = vpop.f32.mrb[0].mxu0
      %v1877 = vpop.f32.mrb[0].mxu0
      %v1878 = vadd.f32 0.0, %v1877
      %v1879 = vpop.f32.mrb[0].mxu0
      %1880 = vmatprep.mubr.bf16.mxu0 0
      %1881 = vmatmul.mubr.bf16.gmra.mrb[0].mxu0 %v1773
      %v1882 = vpop.f32.mrb[0].mxu0
      %v1883 = vadd.f32 0.0, %v1882
      %v1884 = vpop.f32.mrb[0].mxu0
      %v1885 = vpop.f32.mrb[0].mxu0
      %v1886 = vadd.f32 0.0, %v1885
      %v1887 = vpop.f32.mrb[0].mxu0
      %1888 = vmatprep.mubr.bf16.mxu0 0
      %1889 = vmatmul.mubr.bf16.gmra.mrb[0].mxu0 %v1776
      %v1890 = vpop.f32.mrb[0].mxu0
      %v1891 = vadd.f32 0.0, %v1890
      %v1892 = vpop.f32.mrb[0].mxu0
      %v1893 = vpop.f32.mrb[0].mxu0
      %v1894 = vadd.f32 0.0, %v1893
      %v1895 = vpop.f32.mrb[0].mxu0
      %1896 = vmatprep.mubr.bf16.mxu0 0
      %1897 = vmatmul.mubr.bf16.gmra.mrb[0].mxu0 %v1779
      %v1898 = vpop.f32.mrb[0].mxu0
      %v1899 = vadd.f32 0.0, %v1898
      %v1900 = vpop.f32.mrb[0].mxu0
      %v1901 = vpop.f32.mrb[0].mxu0
      %v1902 = vpop.f32.mrb[0].mxu0
      %1903 = vdwg.mxu0
      %v1904 = vadd.f32 %v1626, %v1819
      %v1905 = vadd.f32 %v1627, %v1822
      %v1906 = vadd.f32 %v1628, %v1827
      %v1907 = vadd.f32 %v1629, %v1830
      %v1908 = vadd.f32 %v1630, %v1835
      %v1909 = vadd.f32 %v1631, %v1838
      %v1910 = vadd.f32 %v1632, %v1843
      %v1911 = vadd.f32 %v1633, %v1846
      %v1912 = vadd.f32 %v1634, %v1851
      %v1913 = vadd.f32 %v1635, %v1854
      %v1914 = vadd.f32 %v1636, %v1859
      %v1915 = vadd.f32 %v1637, %v1862
      %v1916 = vadd.f32 %v1638, %v1867
      %v1917 = vadd.f32 %v1639, %v1870
      %v1918 = vadd.f32 %v1640, %v1875
      %v1919 = vadd.f32 %v1641, %v1878
      %v1920 = vadd.f32 %v1642, %v1883
      %v1921 = vadd.f32 %v1643, %v1886
      %v1922 = vadd.f32 %v1644, %v1891
      %v1923 = vadd.f32 %v1645, %v1894
      %v1924 = vadd.f32 %v1646, %v1899
      %v1925 = vld [vmem:[%s207 + $0x60] sm:$0x7]
      %s1926 = scalar_lea.vmem %s1, 28
      %v1927 = vld [vmem:[%s1926] sm:$0xf]
      %v1929 = vunpack.c.l.b16 %v1925
      %v1930 = vpack.c.b16 %v1929, %v1713
      %vm1931 = vsmask.f32 5376
      %v1933 = vshrl.u32 %v1715, 16
      %v1935 = vrot.slane %v1933, 2
      %v1936 = vshll.u32 %v1715, 16
      %v1938 = vrot.slane %v1936, 3
      %v1939 = vor.u32 %v1935, %v1938
      %v1941 = vshrl.u32 %v1716, 16
      %v1943 = vrot.slane %v1941, 2
      %v1944 = vshll.u32 %v1716, 16
      %v1946 = vrot.slane %v1944, 3
      %v1947 = vor.u32 %v1943, %v1946
      %v1948 = vsel %vm1931, %v1939, %v1947
      %v1950 = vshrl.u32 %v1717, 16
      %v1952 = vrot.slane %v1950, 2
      %v1953 = vshll.u32 %v1717, 16
      %v1955 = vrot.slane %v1953, 3
      %v1956 = vor.u32 %v1952, %v1955
      %v1957 = vsel %vm1931, %v1947, %v1956
      %v1959 = vshrl.u32 %v1718, 16
      %v1961 = vrot.slane %v1959, 2
      %v1962 = vshll.u32 %v1718, 16
      %v1964 = vrot.slane %v1962, 3
      %v1965 = vor.u32 %v1961, %v1964
      %v1966 = vsel %vm1931, %v1956, %v1965
      %v1968 = vshrl.u32 %v1719, 16
      %v1970 = vrot.slane %v1968, 2
      %v1971 = vshll.u32 %v1719, 16
      %v1973 = vrot.slane %v1971, 3
      %v1974 = vor.u32 %v1970, %v1973
      %v1975 = vsel %vm1931, %v1965, %v1974
      %v1977 = vshrl.u32 %v1720, 16
      %v1979 = vrot.slane %v1977, 2
      %v1980 = vshll.u32 %v1720, 16
      %v1982 = vrot.slane %v1980, 3
      %v1983 = vor.u32 %v1979, %v1982
      %v1984 = vsel %vm1931, %v1974, %v1983
      %v1986 = vshrl.u32 %v1721, 16
      %v1988 = vrot.slane %v1986, 2
      %v1989 = vshll.u32 %v1721, 16
      %v1991 = vrot.slane %v1989, 3
      %v1992 = vor.u32 %v1988, %v1991
      %v1993 = vsel %vm1931, %v1983, %v1992
      %v1995 = vshrl.u32 %v1722, 16
      %v1997 = vrot.slane %v1995, 2
      %v1998 = vshll.u32 %v1722, 16
      %v2000 = vrot.slane %v1998, 3
      %v2001 = vor.u32 %v1997, %v2000
      %v2002 = vsel %vm1931, %v1992, %v2001
      %v2004 = vshrl.u32 %v1723, 16
      %v2006 = vrot.slane %v2004, 2
      %v2007 = vshll.u32 %v1723, 16
      %v2009 = vrot.slane %v2007, 3
      %v2010 = vor.u32 %v2006, %v2009
      %v2011 = vsel %vm1931, %v2001, %v2010
      %v2013 = vshrl.u32 %v1724, 16
      %v2015 = vrot.slane %v2013, 2
      %v2016 = vshll.u32 %v1724, 16
      %v2018 = vrot.slane %v2016, 3
      %v2019 = vor.u32 %v2015, %v2018
      %v2020 = vsel %vm1931, %v2010, %v2019
      %v2022 = vshrl.u32 %v1930, 16
      %v2024 = vrot.slane %v2022, 2
      %v2025 = vshll.u32 %v1930, 16
      %v2027 = vrot.slane %v2025, 3
      %v2028 = vor.u32 %v2024, %v2027
      %v2029 = vsel %vm1931, %v2019, %v2028
      %v2031 = vsel %vm387, %v1948, 0
      %v2034 = vsel %vm387, %v1957, 0
      %v2037 = vsel %vm387, %v1966, 0
      %v2040 = vsel %vm387, %v1975, 0
      %v2043 = vsel %vm387, %v1984, 0
      %v2046 = vsel %vm387, %v1993, 0
      %v2049 = vsel %vm387, %v2002, 0
      %v2052 = vsel %vm387, %v2011, 0
      %v2055 = vsel %vm387, %v2020, 0
      %v2058 = vsel %vm387, %v2029, 0
      %v2061 = vsel %vm387, %v2028, 0
      %v2064 = vsel %vm421, %v1927, 0
      %2066 = vmatprep.subr.bf16.mxu0 0
      %2067 = vmatpush1.bf16.msra.mxu0 %v2064
      %2068 = vmatprep.subr.bf16.mxu0 0
      %2069 = vmatpush1.bf16.msra.mxu0 0
      %2070 = vmatprep.subr.bf16.mxu0 0
      %2071 = vmatpush1.bf16.msra.mxu0 0
      %2072 = vmatprep.subr.bf16.mxu0 0
      %2073 = vmatpush1.bf16.msra.mxu0 0
      %2074 = vmatprep.subr.bf16.mxu0 0
      %2075 = vmatpush1.bf16.msra.mxu0 0
      %2076 = vmatprep.subr.bf16.mxu0 0
      %2077 = vmatpush1.bf16.msra.mxu0 0
      %2078 = vmatprep.subr.bf16.mxu0 0
      %2079 = vmatpush1.bf16.msra.mxu0 0
      %2080 = vmatprep.subr.bf16.mxu0 0
      %2081 = vmatpush1.bf16.msra.mxu0 0
      %2082 = vmatprep.subr.bf16.mxu0 0
      %2083 = vmatpush1.bf16.msra.mxu0 0
      %2084 = vmatprep.subr.bf16.mxu0 0
      %2085 = vmatpush1.bf16.msra.mxu0 0
      %2086 = vmatprep.subr.bf16.mxu0 0
      %2087 = vmatpush1.bf16.msra.mxu0 0
      %2088 = vmatprep.subr.bf16.mxu0 0
      %2089 = vmatpush1.bf16.msra.mxu0 0
      %2090 = vmatprep.subr.bf16.mxu0 0
      %2091 = vmatpush1.bf16.msra.mxu0 0
      %2092 = vmatprep.subr.bf16.mxu0 0
      %2093 = vmatpush1.bf16.msra.mxu0 0
      %2094 = vmatprep.subr.bf16.mxu0 0
      %2095 = vmatpush1.bf16.msra.mxu0 0
      %2096 = vmatprep.subr.bf16.mxu0 0
      %2097 = vmatpush1.bf16.msra.mxu0 0
      %2098 = vmatprep.mubr.bf16.mxu0 0
      %2099 = vmatmul.mubr.bf16.gmra.mrb[0].mxu0 %v2031
      %v2100 = vpop.f32.mrb[0].mxu0
      %v2101 = vadd.f32 0.0, %v2100
      %v2102 = vpop.f32.mrb[0].mxu0
      %v2103 = vpop.f32.mrb[0].mxu0
      %v2104 = vadd.f32 0.0, %v2103
      %v2105 = vpop.f32.mrb[0].mxu0
      %2106 = vmatprep.mubr.bf16.mxu0 0
      %2107 = vmatmul.mubr.bf16.gmra.mrb[0].mxu0 %v2034
      %v2108 = vpop.f32.mrb[0].mxu0
      %v2109 = vadd.f32 0.0, %v2108
      %v2110 = vpop.f32.mrb[0].mxu0
      %v2111 = vpop.f32.mrb[0].mxu0
      %v2112 = vadd.f32 0.0, %v2111
      %v2113 = vpop.f32.mrb[0].mxu0
      %2114 = vmatprep.mubr.bf16.mxu0 0
      %2115 = vmatmul.mubr.bf16.gmra.mrb[0].mxu0 %v2037
      %v2116 = vpop.f32.mrb[0].mxu0
      %v2117 = vadd.f32 0.0, %v2116
      %v2118 = vpop.f32.mrb[0].mxu0
      %v2119 = vpop.f32.mrb[0].mxu0
      %v2120 = vadd.f32 0.0, %v2119
      %v2121 = vpop.f32.mrb[0].mxu0
      %2122 = vmatprep.mubr.bf16.mxu0 0
      %2123 = vmatmul.mubr.bf16.gmra.mrb[0].mxu0 %v2040
      %v2124 = vpop.f32.mrb[0].mxu0
      %v2125 = vadd.f32 0.0, %v2124
      %v2126 = vpop.f32.mrb[0].mxu0
      %v2127 = vpop.f32.mrb[0].mxu0
      %v2128 = vadd.f32 0.0, %v2127
      %v2129 = vpop.f32.mrb[0].mxu0
      %2130 = vmatprep.mubr.bf16.mxu0 0
      %2131 = vmatmul.mubr.bf16.gmra.mrb[0].mxu0 %v2043
      %v2132 = vpop.f32.mrb[0].mxu0
      %v2133 = vadd.f32 0.0, %v2132
      %v2134 = vpop.f32.mrb[0].mxu0
      %v2135 = vpop.f32.mrb[0].mxu0
      %v2136 = vadd.f32 0.0, %v2135
      %v2137 = vpop.f32.mrb[0].mxu0
      %2138 = vmatprep.mubr.bf16.mxu0 0
      %2139 = vmatmul.mubr.bf16.gmra.mrb[0].mxu0 %v2046
      %v2140 = vpop.f32.mrb[0].mxu0
      %v2141 = vadd.f32 0.0, %v2140
      %v2142 = vpop.f32.mrb[0].mxu0
      %v2143 = vpop.f32.mrb[0].mxu0
      %v2144 = vadd.f32 0.0, %v2143
      %v2145 = vpop.f32.mrb[0].mxu0
      %2146 = vmatprep.mubr.bf16.mxu0 0
      %2147 = vmatmul.mubr.bf16.gmra.mrb[0].mxu0 %v2049
      %v2148 = vpop.f32.mrb[0].mxu0
      %v2149 = vadd.f32 0.0, %v2148
      %v2150 = vpop.f32.mrb[0].mxu0
      %v2151 = vpop.f32.mrb[0].mxu0
      %v2152 = vadd.f32 0.0, %v2151
      %v2153 = vpop.f32.mrb[0].mxu0
      %2154 = vmatprep.mubr.bf16.mxu0 0
      %2155 = vmatmul.mubr.bf16.gmra.mrb[0].mxu0 %v2052
      %v2156 = vpop.f32.mrb[0].mxu0
      %v2157 = vadd.f32 0.0, %v2156
      %v2158 = vpop.f32.mrb[0].mxu0
      %v2159 = vpop.f32.mrb[0].mxu0
      %v2160 = vadd.f32 0.0, %v2159
      %v2161 = vpop.f32.mrb[0].mxu0
      %2162 = vmatprep.mubr.bf16.mxu0 0
      %2163 = vmatmul.mubr.bf16.gmra.mrb[0].mxu0 %v2055
      %v2164 = vpop.f32.mrb[0].mxu0
      %v2165 = vadd.f32 0.0, %v2164
      %v2166 = vpop.f32.mrb[0].mxu0
      %v2167 = vpop.f32.mrb[0].mxu0
      %v2168 = vadd.f32 0.0, %v2167
      %v2169 = vpop.f32.mrb[0].mxu0
      %2170 = vmatprep.mubr.bf16.mxu0 0
      %2171 = vmatmul.mubr.bf16.gmra.mrb[0].mxu0 %v2058
      %v2172 = vpop.f32.mrb[0].mxu0
      %v2173 = vadd.f32 0.0, %v2172
      %v2174 = vpop.f32.mrb[0].mxu0
      %v2175 = vpop.f32.mrb[0].mxu0
      %v2176 = vadd.f32 0.0, %v2175
      %v2177 = vpop.f32.mrb[0].mxu0
      %2178 = vmatprep.mubr.bf16.mxu0 0
      %2179 = vmatmul.mubr.bf16.gmra.mrb[0].mxu0 %v2061
      %v2180 = vpop.f32.mrb[0].mxu0
      %v2181 = vadd.f32 0.0, %v2180
      %v2182 = vpop.f32.mrb[0].mxu0
      %v2183 = vpop.f32.mrb[0].mxu0
      %v2184 = vpop.f32.mrb[0].mxu0
      %2185 = vdwg.mxu0
      %v2186 = vadd.f32 %v1904, %v2101
      %v2187 = vadd.f32 %v1905, %v2104
      %v2188 = vadd.f32 %v1906, %v2109
      %v2189 = vadd.f32 %v1907, %v2112
      %v2190 = vadd.f32 %v1908, %v2117
      %v2191 = vadd.f32 %v1909, %v2120
      %v2192 = vadd.f32 %v1910, %v2125
      %v2193 = vadd.f32 %v1911, %v2128
      %v2194 = vadd.f32 %v1912, %v2133
      %v2195 = vadd.f32 %v1913, %v2136
      %v2196 = vadd.f32 %v1914, %v2141
      %v2197 = vadd.f32 %v1915, %v2144
      %v2198 = vadd.f32 %v1916, %v2149
      %v2199 = vadd.f32 %v1917, %v2152
      %v2200 = vadd.f32 %v1918, %v2157
      %v2201 = vadd.f32 %v1919, %v2160
      %v2202 = vadd.f32 %v1920, %v2165
      %v2203 = vadd.f32 %v1921, %v2168
      %v2204 = vadd.f32 %v1922, %v2173
      %v2205 = vadd.f32 %v1923, %v2176
      %v2206 = vadd.f32 %v1924, %v2181
      %v2207 = vld [vmem:[%s207 + $0xc] sm:$0x8]
      %s2208 = scalar_lea.vmem %s1, 32
      %v2209 = vld [vmem:[%s2208] sm:$0xf]
      %v2211 = vunpack.c.l.b16 %v2207
      %v2212 = vpack.c.b16 %v1694, %v2211
      %v2213 = vrot.slane %v2212, 3
      %v2214 = vrot.slane %v1716, 3
      %v2215 = vsel %vm976, %v2213, %v2214
      %v2216 = vrot.slane %v1717, 3
      %v2217 = vsel %vm976, %v2214, %v2216
      %v2218 = vrot.slane %v1718, 3
      %v2219 = vsel %vm976, %v2216, %v2218
      %v2220 = vrot.slane %v1719, 3
      %v2221 = vsel %vm976, %v2218, %v2220
      %v2222 = vrot.slane %v1720, 3
      %v2223 = vsel %vm976, %v2220, %v2222
      %v2224 = vrot.slane %v1721, 3
      %v2225 = vsel %vm976, %v2222, %v2224
      %v2226 = vrot.slane %v1722, 3
      %v2227 = vsel %vm976, %v2224, %v2226
      %v2228 = vrot.slane %v1723, 3
      %v2229 = vsel %vm976, %v2226, %v2228
      %v2230 = vrot.slane %v1724, 3
      %v2231 = vsel %vm976, %v2228, %v2230
      %v2232 = vrot.slane %v1930, 3
      %v2233 = vsel %vm976, %v2230, %v2232
      %v2235 = vsel %vm387, %v2215, 0
      %v2238 = vsel %vm387, %v2217, 0
      %v2241 = vsel %vm387, %v2219, 0
      %v2244 = vsel %vm387, %v2221, 0
      %v2247 = vsel %vm387, %v2223, 0
      %v2250 = vsel %vm387, %v2225, 0
      %v2253 = vsel %vm387, %v2227, 0
      %v2256 = vsel %vm387, %v2229, 0
      %v2259 = vsel %vm387, %v2231, 0
      %v2262 = vsel %vm387, %v2233, 0
      %v2265 = vsel %vm387, %v2232, 0
      %v2268 = vsel %vm421, %v2209, 0
      %2270 = vmatprep.subr.bf16.mxu0 0
      %2271 = vmatpush1.bf16.msra.mxu0 %v2268
      %2272 = vmatprep.subr.bf16.mxu0 0
      %2273 = vmatpush1.bf16.msra.mxu0 0
      %2274 = vmatprep.subr.bf16.mxu0 0
      %2275 = vmatpush1.bf16.msra.mxu0 0
      %2276 = vmatprep.subr.bf16.mxu0 0
      %2277 = vmatpush1.bf16.msra.mxu0 0
      %2278 = vmatprep.subr.bf16.mxu0 0
      %2279 = vmatpush1.bf16.msra.mxu0 0
      %2280 = vmatprep.subr.bf16.mxu0 0
      %2281 = vmatpush1.bf16.msra.mxu0 0
      %2282 = vmatprep.subr.bf16.mxu0 0
      %2283 = vmatpush1.bf16.msra.mxu0 0
      %2284 = vmatprep.subr.bf16.mxu0 0
      %2285 = vmatpush1.bf16.msra.mxu0 0
      %2286 = vmatprep.subr.bf16.mxu0 0
      %2287 = vmatpush1.bf16.msra.mxu0 0
      %2288 = vmatprep.subr.bf16.mxu0 0
      %2289 = vmatpush1.bf16.msra.mxu0 0
      %2290 = vmatprep.subr.bf16.mxu0 0
      %2291 = vmatpush1.bf16.msra.mxu0 0
      %2292 = vmatprep.subr.bf16.mxu0 0
      %2293 = vmatpush1.bf16.msra.mxu0 0
      %2294 = vmatprep.subr.bf16.mxu0 0
      %2295 = vmatpush1.bf16.msra.mxu0 0
      %2296 = vmatprep.subr.bf16.mxu0 0
      %2297 = vmatpush1.bf16.msra.mxu0 0
      %2298 = vmatprep.subr.bf16.mxu0 0
      %2299 = vmatpush1.bf16.msra.mxu0 0
      %2300 = vmatprep.subr.bf16.mxu0 0
      %2301 = vmatpush1.bf16.msra.mxu0 0
      %2302 = vmatprep.mubr.bf16.mxu0 0
      %2303 = vmatmul.mubr.bf16.gmra.mrb[0].mxu0 %v2235
      %v2304 = vpop.f32.mrb[0].mxu0
      %v2305 = vadd.f32 0.0, %v2304
      %v2306 = vpop.f32.mrb[0].mxu0
      %v2307 = vpop.f32.mrb[0].mxu0
      %v2308 = vadd.f32 0.0, %v2307
      %v2309 = vpop.f32.mrb[0].mxu0
      %2310 = vmatprep.mubr.bf16.mxu0 0
      %2311 = vmatmul.mubr.bf16.gmra.mrb[0].mxu0 %v2238
      %v2312 = vpop.f32.mrb[0].mxu0
      %v2313 = vadd.f32 0.0, %v2312
      %v2314 = vpop.f32.mrb[0].mxu0
      %v2315 = vpop.f32.mrb[0].mxu0
      %v2316 = vadd.f32 0.0, %v2315
      %v2317 = vpop.f32.mrb[0].mxu0
      %2318 = vmatprep.mubr.bf16.mxu0 0
      %2319 = vmatmul.mubr.bf16.gmra.mrb[0].mxu0 %v2241
      %v2320 = vpop.f32.mrb[0].mxu0
      %v2321 = vadd.f32 0.0, %v2320
      %v2322 = vpop.f32.mrb[0].mxu0
      %v2323 = vpop.f32.mrb[0].mxu0
      %v2324 = vadd.f32 0.0, %v2323
      %v2325 = vpop.f32.mrb[0].mxu0
      %2326 = vmatprep.mubr.bf16.mxu0 0
      %2327 = vmatmul.mubr.bf16.gmra.mrb[0].mxu0 %v2244
      %v2328 = vpop.f32.mrb[0].mxu0
      %v2329 = vadd.f32 0.0, %v2328
      %v2330 = vpop.f32.mrb[0].mxu0
      %v2331 = vpop.f32.mrb[0].mxu0
      %v2332 = vadd.f32 0.0, %v2331
      %v2333 = vpop.f32.mrb[0].mxu0
      %2334 = vmatprep.mubr.bf16.mxu0 0
      %2335 = vmatmul.mubr.bf16.gmra.mrb[0].mxu0 %v2247
      %v2336 = vpop.f32.mrb[0].mxu0
      %v2337 = vadd.f32 0.0, %v2336
      %v2338 = vpop.f32.mrb[0].mxu0
      %v2339 = vpop.f32.mrb[0].mxu0
      %v2340 = vadd.f32 0.0, %v2339
      %v2341 = vpop.f32.mrb[0].mxu0
      %2342 = vmatprep.mubr.bf16.mxu0 0
      %2343 = vmatmul.mubr.bf16.gmra.mrb[0].mxu0 %v2250
      %v2344 = vpop.f32.mrb[0].mxu0
      %v2345 = vadd.f32 0.0, %v2344
      %v2346 = vpop.f32.mrb[0].mxu0
      %v2347 = vpop.f32.mrb[0].mxu0
      %v2348 = vadd.f32 0.0, %v2347
      %v2349 = vpop.f32.mrb[0].mxu0
      %2350 = vmatprep.mubr.bf16.mxu0 0
      %2351 = vmatmul.mubr.bf16.gmra.mrb[0].mxu0 %v2253
      %v2352 = vpop.f32.mrb[0].mxu0
      %v2353 = vadd.f32 0.0, %v2352
      %v2354 = vpop.f32.mrb[0].mxu0
      %v2355 = vpop.f32.mrb[0].mxu0
      %v2356 = vadd.f32 0.0, %v2355
      %v2357 = vpop.f32.mrb[0].mxu0
      %2358 = vmatprep.mubr.bf16.mxu0 0
      %2359 = vmatmul.mubr.bf16.gmra.mrb[0].mxu0 %v2256
      %v2360 = vpop.f32.mrb[0].mxu0
      %v2361 = vadd.f32 0.0, %v2360
      %v2362 = vpop.f32.mrb[0].mxu0
      %v2363 = vpop.f32.mrb[0].mxu0
      %v2364 = vadd.f32 0.0, %v2363
      %v2365 = vpop.f32.mrb[0].mxu0
      %2366 = vmatprep.mubr.bf16.mxu0 0
      %2367 = vmatmul.mubr.bf16.gmra.mrb[0].mxu0 %v2259
      %v2368 = vpop.f32.mrb[0].mxu0
      %v2369 = vadd.f32 0.0, %v2368
      %v2370 = vpop.f32.mrb[0].mxu0
      %v2371 = vpop.f32.mrb[0].mxu0
      %v2372 = vadd.f32 0.0, %v2371
      %v2373 = vpop.f32.mrb[0].mxu0
      %2374 = vmatprep.mubr.bf16.mxu0 0
      %2375 = vmatmul.mubr.bf16.gmra.mrb[0].mxu0 %v2262
      %v2376 = vpop.f32.mrb[0].mxu0
      %v2377 = vadd.f32 0.0, %v2376
      %v2378 = vpop.f32.mrb[0].mxu0
      %v2379 = vpop.f32.mrb[0].mxu0
      %v2380 = vadd.f32 0.0, %v2379
      %v2381 = vpop.f32.mrb[0].mxu0
      %2382 = vmatprep.mubr.bf16.mxu0 0
      %2383 = vmatmul.mubr.bf16.gmra.mrb[0].mxu0 %v2265
      %v2384 = vpop.f32.mrb[0].mxu0
      %v2385 = vadd.f32 0.0, %v2384
      %v2386 = vpop.f32.mrb[0].mxu0
      %v2387 = vpop.f32.mrb[0].mxu0
      %v2388 = vpop.f32.mrb[0].mxu0
      %2389 = vdwg.mxu0
      %v2390 = vadd.f32 %v2186, %v2305
      %v2391 = vadd.f32 %v2187, %v2308
      %v2392 = vadd.f32 %v2188, %v2313
      %v2393 = vadd.f32 %v2189, %v2316
      %v2394 = vadd.f32 %v2190, %v2321
      %v2395 = vadd.f32 %v2191, %v2324
      %v2396 = vadd.f32 %v2192, %v2329
      %v2397 = vadd.f32 %v2193, %v2332
      %v2398 = vadd.f32 %v2194, %v2337
      %v2399 = vadd.f32 %v2195, %v2340
      %v2400 = vadd.f32 %v2196, %v2345
      %v2401 = vadd.f32 %v2197, %v2348
      %v2402 = vadd.f32 %v2198, %v2353
      %v2403 = vadd.f32 %v2199, %v2356
      %v2404 = vadd.f32 %v2200, %v2361
      %v2405 = vadd.f32 %v2201, %v2364
      %v2406 = vadd.f32 %v2202, %v2369
      %v2407 = vadd.f32 %v2203, %v2372
      %v2408 = vadd.f32 %v2204, %v2377
      %v2409 = vadd.f32 %v2205, %v2380
      %v2410 = vadd.f32 %v2206, %v2385
      %v2411 = vld [vmem:[%s2] sm:$0x1]
      %v2413 = vlaneseq
      %v2414 = vshrl.u32 %v2413, 7
      %v2415 = vsub.s32 0, %v2414
      %v2416 = vrot.slane %v2411, %v2415
      %v2418 = vadd.f32 %v2390, %v2416
      %v2419 = vadd.f32 %v2391, %v2416
      %v2420 = vadd.f32 %v2392, %v2416
      %v2421 = vadd.f32 %v2393, %v2416
      %v2422 = vadd.f32 %v2394, %v2416
      %v2423 = vadd.f32 %v2395, %v2416
      %v2424 = vadd.f32 %v2396, %v2416
      %v2425 = vadd.f32 %v2397, %v2416
      %v2426 = vadd.f32 %v2398, %v2416
      %v2427 = vadd.f32 %v2399, %v2416
      %v2428 = vadd.f32 %v2400, %v2416
      %v2429 = vadd.f32 %v2401, %v2416
      %v2430 = vadd.f32 %v2402, %v2416
      %v2431 = vadd.f32 %v2403, %v2416
      %v2432 = vadd.f32 %v2404, %v2416
      %v2433 = vadd.f32 %v2405, %v2416
      %v2434 = vadd.f32 %v2406, %v2416
      %v2435 = vadd.f32 %v2407, %v2416
      %v2436 = vadd.f32 %v2408, %v2416
      %v2437 = vadd.f32 %v2409, %v2416
      %v2438 = vadd.f32 %v2410, %v2416
      %vm2439 = vcmp.ge.f32.partialorder %v2418, 0.0
      %vm2440 = vcmp.ge.f32.partialorder %v2419, 0.0
      %vm2441 = vcmp.ge.f32.partialorder %v2420, 0.0
      %vm2442 = vcmp.ge.f32.partialorder %v2421, 0.0
      %vm2443 = vcmp.ge.f32.partialorder %v2422, 0.0
      %vm2444 = vcmp.ge.f32.partialorder %v2423, 0.0
      %vm2445 = vcmp.ge.f32.partialorder %v2424, 0.0
      %vm2446 = vcmp.ge.f32.partialorder %v2425, 0.0
      %vm2447 = vcmp.ge.f32.partialorder %v2426, 0.0
      %vm2448 = vcmp.ge.f32.partialorder %v2427, 0.0
      %vm2449 = vcmp.ge.f32.partialorder %v2428, 0.0
      %vm2450 = vcmp.ge.f32.partialorder %v2429, 0.0
      %vm2451 = vcmp.ge.f32.partialorder %v2430, 0.0
      %vm2452 = vcmp.ge.f32.partialorder %v2431, 0.0
      %vm2453 = vcmp.ge.f32.partialorder %v2432, 0.0
      %vm2454 = vcmp.ge.f32.partialorder %v2433, 0.0
      %vm2455 = vcmp.ge.f32.partialorder %v2434, 0.0
      %vm2456 = vcmp.ge.f32.partialorder %v2435, 0.0
      %vm2457 = vcmp.ge.f32.partialorder %v2436, 0.0
      %vm2458 = vcmp.ge.f32.partialorder %v2437, 0.0
      %vm2459 = vcmp.ge.f32.partialorder %v2438, 0.0
      %v2460 = vmul.f32 %v2418, 0.1
      %v2461 = vmul.f32 %v2419, 0.1
      %v2462 = vmul.f32 %v2420, 0.1
      %v2463 = vmul.f32 %v2421, 0.1
      %v2464 = vmul.f32 %v2422, 0.1
      %v2465 = vmul.f32 %v2423, 0.1
      %v2466 = vmul.f32 %v2424, 0.1
      %v2467 = vmul.f32 %v2425, 0.1
      %v2468 = vmul.f32 %v2426, 0.1
      %v2469 = vmul.f32 %v2427, 0.1
      %v2470 = vmul.f32 %v2428, 0.1
      %v2471 = vmul.f32 %v2429, 0.1
      %v2472 = vmul.f32 %v2430, 0.1
      %v2473 = vmul.f32 %v2431, 0.1
      %v2474 = vmul.f32 %v2432, 0.1
      %v2475 = vmul.f32 %v2433, 0.1
      %v2476 = vmul.f32 %v2434, 0.1
      %v2477 = vmul.f32 %v2435, 0.1
      %v2478 = vmul.f32 %v2436, 0.1
      %v2479 = vmul.f32 %v2437, 0.1
      %v2480 = vmul.f32 %v2438, 0.1
      %v2481 = vsel %vm2439, %v2418, %v2460
      %v2482 = vsel %vm2440, %v2419, %v2461
      %v2483 = vsel %vm2441, %v2420, %v2462
      %v2484 = vsel %vm2442, %v2421, %v2463
      %v2485 = vsel %vm2443, %v2422, %v2464
      %v2486 = vsel %vm2444, %v2423, %v2465
      %v2487 = vsel %vm2445, %v2424, %v2466
      %v2488 = vsel %vm2446, %v2425, %v2467
      %v2489 = vsel %vm2447, %v2426, %v2468
      %v2490 = vsel %vm2448, %v2427, %v2469
      %v2491 = vsel %vm2449, %v2428, %v2470
      %v2492 = vsel %vm2450, %v2429, %v2471
      %v2493 = vsel %vm2451, %v2430, %v2472
      %v2494 = vsel %vm2452, %v2431, %v2473
      %v2495 = vsel %vm2453, %v2432, %v2474
      %v2496 = vsel %vm2454, %v2433, %v2475
      %v2497 = vsel %vm2455, %v2434, %v2476
      %v2498 = vsel %vm2456, %v2435, %v2477
      %v2499 = vsel %vm2457, %v2436, %v2478
      %v2500 = vsel %vm2458, %v2437, %v2479
      %v2501 = vsel %vm2459, %v2438, %v2480
      %v2502 = vld [vmem:[%s212] sm:$0xf]
      %v2503 = vld [vmem:[%s212 + $0x4] sm:$0xf]
      %v2504 = vld [vmem:[%s212 + $0x8] sm:$0xf]
      %v2505 = vld [vmem:[%s212 + $0xc] sm:$0xf]
      %v2506 = vld [vmem:[%s212 + $0x10] sm:$0xf]
      %v2507 = vld [vmem:[%s212 + $0x14] sm:$0xf]
      %v2508 = vld [vmem:[%s212 + $0x18] sm:$0xf]
      %v2509 = vld [vmem:[%s212 + $0x1c] sm:$0xf]
      %v2510 = vld [vmem:[%s212 + $0x20] sm:$0xf]
      %v2511 = vld [vmem:[%s212 + $0x24] sm:$0xf]
      %v2512 = vld [vmem:[%s212 + $0x28] sm:$0xf]
      %v2513 = vld [vmem:[%s212 + $0x2c] sm:$0xf]
      %v2514 = vld [vmem:[%s212 + $0x30] sm:$0xf]
      %v2515 = vld [vmem:[%s212 + $0x34] sm:$0xf]
      %v2516 = vld [vmem:[%s212 + $0x38] sm:$0xf]
      %v2517 = vld [vmem:[%s212 + $0x3c] sm:$0xf]
      %v2518 = vld [vmem:[%s212 + $0x40] sm:$0xf]
      %v2519 = vld [vmem:[%s212 + $0x44] sm:$0xf]
      %v2520 = vld [vmem:[%s212 + $0x48] sm:$0xf]
      %v2521 = vld [vmem:[%s212 + $0x4c] sm:$0xf]
      %v2522 = vld [vmem:[%s212 + $0x50] sm:$0xf]
      %v2523 = vunpack.c.l.bf16 %v2502
      %v2524 = vunpack.c.l.bf16 %v2503
      %v2525 = vunpack.c.l.bf16 %v2504
      %v2526 = vunpack.c.l.bf16 %v2505
      %v2527 = vunpack.c.l.bf16 %v2506
      %v2528 = vunpack.c.l.bf16 %v2507
      %v2529 = vunpack.c.l.bf16 %v2508
      %v2530 = vunpack.c.l.bf16 %v2509
      %v2531 = vunpack.c.l.bf16 %v2510
      %v2532 = vunpack.c.l.bf16 %v2511
      %v2533 = vunpack.c.l.bf16 %v2512
      %v2534 = vunpack.c.l.bf16 %v2513
      %v2535 = vunpack.c.l.bf16 %v2514
      %v2536 = vunpack.c.l.bf16 %v2515
      %v2537 = vunpack.c.l.bf16 %v2516
      %v2538 = vunpack.c.l.bf16 %v2517
      %v2539 = vunpack.c.l.bf16 %v2518
      %v2540 = vunpack.c.l.bf16 %v2519
      %v2541 = vunpack.c.l.bf16 %v2520
      %v2542 = vunpack.c.l.bf16 %v2521
      %v2543 = vunpack.c.l.bf16 %v2522
      %v2544 = vadd.f32 %v2481, %v2523
      %v2545 = vadd.f32 %v2482, %v2524
      %v2546 = vadd.f32 %v2483, %v2525
      %v2547 = vadd.f32 %v2484, %v2526
      %v2548 = vadd.f32 %v2485, %v2527
      %v2549 = vadd.f32 %v2486, %v2528
      %v2550 = vadd.f32 %v2487, %v2529
      %v2551 = vadd.f32 %v2488, %v2530
      %v2552 = vadd.f32 %v2489, %v2531
      %v2553 = vadd.f32 %v2490, %v2532
      %v2554 = vadd.f32 %v2491, %v2533
      %v2555 = vadd.f32 %v2492, %v2534
      %v2556 = vadd.f32 %v2493, %v2535
      %v2557 = vadd.f32 %v2494, %v2536
      %v2558 = vadd.f32 %v2495, %v2537
      %v2559 = vadd.f32 %v2496, %v2538
      %v2560 = vadd.f32 %v2497, %v2539
      %v2561 = vadd.f32 %v2498, %v2540
      %v2562 = vadd.f32 %v2499, %v2541
      %v2563 = vadd.f32 %v2500, %v2542
      %v2564 = vadd.f32 %v2501, %v2543
      %v2565 = vpack.c.bf16 %v2545, %v2544
      %v2566 = vpack.c.bf16 %v2547, %v2546
      %v2567 = vpack.c.bf16 %v2549, %v2548
      %v2568 = vpack.c.bf16 %v2551, %v2550
      %v2569 = vpack.c.bf16 %v2553, %v2552
      %v2570 = vpack.c.bf16 %v2555, %v2554
      %v2571 = vpack.c.bf16 %v2557, %v2556
      %v2572 = vpack.c.bf16 %v2559, %v2558
      %v2573 = vpack.c.bf16 %v2561, %v2560
      %v2574 = vpack.c.bf16 %v2563, %v2562
      %v2575 = vpack.c.bf16 %v2564, %v2564
      %v2587 = vunpack.c.l.b16 %v2565
      %v2588 = vunpack.c.h.b16 %v2565
      %v2589 = vunpack.c.l.b16 %v2566
      %v2590 = vunpack.c.h.b16 %v2566
      %v2591 = vunpack.c.l.b16 %v2567
      %v2592 = vunpack.c.h.b16 %v2567
      %v2593 = vunpack.c.l.b16 %v2568
      %v2594 = vunpack.c.h.b16 %v2568
      %v2595 = vunpack.c.l.b16 %v2569
      %v2596 = vunpack.c.h.b16 %v2569
      %v2597 = vunpack.c.l.b16 %v2570
      %v2598 = vunpack.c.h.b16 %v2570
      %v2599 = vunpack.c.l.b16 %v2571
      %v2600 = vunpack.c.h.b16 %v2571
      %v2601 = vunpack.c.l.b16 %v2572
      %v2602 = vunpack.c.h.b16 %v2572
      %v2603 = vunpack.c.l.b16 %v2573
      %v2604 = vunpack.c.h.b16 %v2573
      %v2605 = vunpack.c.l.b16 %v2574
      %v2606 = vunpack.c.h.b16 %v2574
      %v2607 = vunpack.c.l.b16 %v2575
      %v2608 = vpack.c.b16 %v2587, %v2587
      %v2609 = vpack.c.b16 %v2588, %v2588
      %v2610 = vpack.c.b16 %v2589, %v2589
      %v2611 = vpack.c.b16 %v2590, %v2590
      %v2612 = vpack.c.b16 %v2591, %v2591
      %v2613 = vpack.c.b16 %v2592, %v2592
      %v2614 = vpack.c.b16 %v2593, %v2593
      %v2615 = vpack.c.b16 %v2594, %v2594
      %v2616 = vpack.c.b16 %v2595, %v2595
      %v2617 = vpack.c.b16 %v2596, %v2596
      %v2618 = vpack.c.b16 %v2597, %v2597
      %v2619 = vpack.c.b16 %v2598, %v2598
      %v2620 = vpack.c.b16 %v2599, %v2599
      %v2621 = vpack.c.b16 %v2600, %v2600
      %v2622 = vpack.c.b16 %v2601, %v2601
      %v2623 = vpack.c.b16 %v2602, %v2602
      %v2624 = vpack.c.b16 %v2603, %v2603
      %v2625 = vpack.c.b16 %v2604, %v2604
      %v2626 = vpack.c.b16 %v2605, %v2605
      %v2627 = vpack.c.b16 %v2606, %v2606
      %v2628 = vpack.c.b16 %v2607, %v2607
      %vm2650 = vcmask 125952
      %2651 = vst.msk [vmem:[%s217] sm:$0xf] %vm2650, %v2608
      %2652 = vst.msk [vmem:[%s217 + $0x4] sm:$0xf] %vm2650, %v2609
      %2653 = vst.msk [vmem:[%s217 + $0x8] sm:$0xf] %vm2650, %v2610
      %2654 = vst.msk [vmem:[%s217 + $0xc] sm:$0xf] %vm2650, %v2611
      %2655 = vst.msk [vmem:[%s217 + $0x10] sm:$0xf] %vm2650, %v2612
      %2656 = vst.msk [vmem:[%s217 + $0x14] sm:$0xf] %vm2650, %v2613
      %2657 = vst.msk [vmem:[%s217 + $0x18] sm:$0xf] %vm2650, %v2614
      %2658 = vst.msk [vmem:[%s217 + $0x1c] sm:$0xf] %vm2650, %v2615
      %2659 = vst.msk [vmem:[%s217 + $0x20] sm:$0xf] %vm2650, %v2616
      %2660 = vst.msk [vmem:[%s217 + $0x24] sm:$0xf] %vm2650, %v2617
      %2661 = vst.msk [vmem:[%s217 + $0x28] sm:$0xf] %vm2650, %v2618
      %2662 = vst.msk [vmem:[%s217 + $0x2c] sm:$0xf] %vm2650, %v2619
      %2663 = vst.msk [vmem:[%s217 + $0x30] sm:$0xf] %vm2650, %v2620
      %2664 = vst.msk [vmem:[%s217 + $0x34] sm:$0xf] %vm2650, %v2621
      %2665 = vst.msk [vmem:[%s217 + $0x38] sm:$0xf] %vm2650, %v2622
      %2666 = vst.msk [vmem:[%s217 + $0x3c] sm:$0xf] %vm2650, %v2623
      %2667 = vst.msk [vmem:[%s217 + $0x40] sm:$0xf] %vm2650, %v2624
      %2668 = vst.msk [vmem:[%s217 + $0x44] sm:$0xf] %vm2650, %v2625
      %2669 = vst.msk [vmem:[%s217 + $0x48] sm:$0xf] %vm2650, %v2626
      %2670 = vst.msk [vmem:[%s217 + $0x4c] sm:$0xf] %vm2650, %v2627
      %2671 = vst.msk [vmem:[%s217 + $0x50] sm:$0xf] %vm2650, %v2628
      %p2672 = scmp.lt.s32.totalorder %s15, 1
      %s2673 = scalar_select %p2672, %s15, 1
      %s2674 = smul.addr %s2673, 21
      %s2675 = smul.addr %s2674, 4
      %s2676 = scalar_lea.vmem %s4, %s2675
      // Predicated region
      $region37: #{tpu_custom_call.1} parent=35 // pred_check
        %p2677 = pneg %p127
      $region38: #{tpu_custom_call.1} parent=35 // pred_check_branch
        %2679 = sbr.rel (%p2677) target = $region40
      $region39: #{tpu_custom_call.1} parent=35 // pred_region
        _
      $region40: #{tpu_custom_call.1} parent=35 // pred_fallthru
        _
    $region36: #{tpu_custom_call.1} parent=5 // pred_fallthru
      _
    %p2680 = scmp.le.s32.totalorder 2, %s10
    // Predicated region
    $region41: #{tpu_custom_call.1} parent=5 // pred_check
      %p2681 = pneg %p2680
    $region42: #{tpu_custom_call.1} parent=5 // pred_check_branch
      %2683 = sbr.rel (%p2681) target = $region44
    $region43: #{tpu_custom_call.1} parent=5 // pred_region
      %s2684 = ssub.s32 %s10, 2
      // Predicated region
      $region45: #{tpu_custom_call.1} parent=43 // pred_check
        %p2685 = pneg %p133
      $region46: #{tpu_custom_call.1} parent=43 // pred_check_branch
        %2687 = sbr.rel (%p2685) target = $region48
      $region47: #{tpu_custom_call.1} parent=43 // pred_region
        %p2688 = scmp.lt.s32.totalorder %s16, 1
        %s2689 = scalar_select %p2688, %s16, 1
        %s2690 = smul.addr %s2689, 21
        %s2691 = smul.addr %s2690, 4
        %s2692 = scalar_lea.vmem %s4, %s2691
      $region48: #{tpu_custom_call.1} parent=43 // pred_fallthru
        _
    $region44: #{tpu_custom_call.1} parent=5 // pred_fallthru
      _
  $region6: #{tpu_custom_call.1} parent=0 // loop_footer
    %s14 = sadd.s32 1, %s10
  $region7: #{tpu_custom_call.1} parent=0 // loop_footer_branch
    %9 = sbr.rel target = $region3
  $region8: #{tpu_custom_call.1} parent=0 // loop_exit
    _

</llo_original>
